<compile_context>
chip_gen: v6e
topology: v6e:2x2x1
jax: 0.10.0
libtpu: 0.0.40
codegen_flags: <defaults>
</compile_context>

<pallas_src>
import jax
import jax.numpy as jnp
from jax import lax
from jax.experimental import pallas as pl
from jax.experimental.pallas import tpu as pltpu

BN_EPS = 1e-5


# ----------------------------- Pallas kernels ---------------------------------------------

def _stats_kernel(up_ref, x_ref, tw_ref, tb_ref, xw_ref, xb_ref,
                  su_ref, qu_ref, sx_ref, qx_ref):
    """Phase 1: per-tile partial sum / sum-of-squares of ReLU(conv(.)+bias), per channel."""
    # up branch: ConvTranspose2d taps as (4*up_out, Cu) @ (Cu, T_up); f32 in, bf16 MXU, f32 acc
    yu = jnp.dot(tw_ref[...], up_ref[0].astype(jnp.bfloat16),
                 preferred_element_type=jnp.float32)
    yu = jnp.maximum(yu + tb_ref[...], 0.0)
    # (C, 1) column partials: tiny volume; lane-dense variant skipped for robustness.
    su_ref[0, 0] = jnp.sum(yu, axis=1, keepdims=True)
    qu_ref[0, 0] = jnp.sum(yu * yu, axis=1, keepdims=True)
    # x branch: 1x1 conv as (x_out, Cx) @ (Cx, T_x)
    yx = jnp.dot(xw_ref[...], x_ref[0].astype(jnp.bfloat16),
                 preferred_element_type=jnp.float32)
    yx = jnp.maximum(yx + xb_ref[...], 0.0)
    sx_ref[0, 0] = jnp.sum(yx, axis=1, keepdims=True)
    qx_ref[0, 0] = jnp.sum(yx * yx, axis=1, keepdims=True)


def _apply_kernel(up_ref, x_ref, tw_ref, tb_ref, xw_ref, xb_ref,
                  scu_ref, shu_ref, scx_ref, shx_ref, ou_ref, ox_ref):
    """Phase 2: recompute conv+bias+ReLU per tile, apply per-channel BN scale/shift, store bf16."""
    yu = jnp.dot(tw_ref[...], up_ref[0].astype(jnp.bfloat16),
                 preferred_element_type=jnp.float32)
    yu = jnp.maximum(yu + tb_ref[...], 0.0)
    ou_ref[0] = (yu * scu_ref[...] + shu_ref[...]).astype(ou_ref.dtype)
    yx = jnp.dot(xw_ref[...], x_ref[0].astype(jnp.bfloat16),
                 preferred_element_type=jnp.float32)
    yx = jnp.maximum(yx + xb_ref[...], 0.0)
    ox_ref[0] = (yx * scx_ref[...] + shx_ref[...]).astype(ox_ref.dtype)


# ----------------------------- Tiling / VMEM heuristics ------------------------------------

def _vmem_capacity_bytes():
    try:
        return int(pltpu.get_tpu_info().vmem_capacity_bytes)
    except Exception:
        return 64 << 20          # conservative default (v7x per-TensorCore capacity)


def _pick_spatial_tile(s_up, per_lane, fixed_bytes, cap, n_batch):
    """Largest lane tile (multiple of 128 dividing s_up, or the full extent) whose per-step
    working set fits a per-generation VMEM budget, capped so N*G keeps the grid busy."""
    # 128 MiB parts (v5e/v6e) can afford cap//3; 64 MiB v7x gets cap//4. Weights/scales are
    # grid-resident and counted separately via fixed_bytes.
    budget = (cap // 3 if cap >= (96 << 20) else cap // 4) - fixed_bytes
    if s_up % 128 != 0:
        # TODO(synk): pad / mask a remainder tile instead of falling back to the full extent.
        return s_up
    max_lanes = max(budget // max(per_lane, 1), 128)
    # Keep at least ~8 total grid steps so both v7x TensorCores get work and the
    # pipeliner has something to overlap DMA with.
    want_g = max(2, -(-8 // max(n_batch, 1)))          # ceil(8 / N), at least 2
    par_lanes = max(s_up // want_g, 128)
    t = min(max_lanes, par_lanes, s_up)
    t = max((t // 128) * 128, 128)
    while s_up % t:
        t -= 128
    return t


def _per_lane_bytes(cu, cx, up_out, x_out):
    """Per-T_up-lane VMEM bytes of one grid step (inputs/outputs double-buffered)."""
    inputs_f32 = 2 * 4 * (cu + 4 * cx)          # f32 input blocks, 2 buffers
    inputs_b16 = 2 * (cu + 4 * cx)              # in-kernel bf16 casts (single copy)
    acc_f32 = 4 * (4 * up_out + 4 * x_out)      # f32 matmul results yu / yx
    out_b16 = 2 * 2 * (4 * up_out + 4 * x_out)  # bf16 phase-2 outputs, 2 buffers
    return inputs_f32 + inputs_b16 + acc_f32 + out_b16


# ----------------------------- Forward wrapper ---------------------------------------------

@jax.jit
def unet_block_forward(up_p, x_p, params):
    """up_p: (N, up_in, H, W) NCHW; x_p: (N, x_in, 2H, 2W) NCHW -> (N, n_out, 2H, 2W) NCHW f32."""
    N, Cu, H, W = up_p.shape
    Nx, Cx, H2, W2 = x_p.shape
    assert N == Nx and H2 == 2 * H and W2 == 2 * W

    tr_w, tr_b = params["tr_w"], params["tr_b"]      # (Cu, up_out, 2, 2), (up_out,)
    x_w, x_b = params["x_w"], params["x_b"]          # (x_out, Cx, 1, 1), (x_out,)
    gamma, beta = params["gamma"], params["beta"]    # (n_out,), (n_out,)
    up_out = tr_w.shape[1]
    x_out = x_w.shape[0]

    S_up = H * W
    S_x = H2 * W2                                    # = 4 * S_up
    cap = _vmem_capacity_bytes()
    fixed = (2 * 2 * (4 * up_out * Cu + x_out * Cx)          # bf16 weights, double-buffered
             + 2 * 4 * 4 * (4 * up_out + x_out)              # f32 bias/scale/shift columns
             + (2 << 20))                                    # Mosaic internal scratch slack
    T_up = _pick_spatial_tile(S_up, _per_lane_bytes(Cu, Cx, up_out, x_out), fixed, cap, N)
    T_x = 4 * T_up
    G = S_up // T_up
    vmem_limit = int(min(cap * 3 // 4, 112 << 20))

    # NCHW with flattened spatial (free reshapes); activations stay f32, cast happens in-kernel.
    up3 = up_p.reshape(N, Cu, S_up)
    x3 = x_p.reshape(N, Cx, S_x)

    # ConvTranspose2d weight (Cu, up_out, 2, 2) -> (4*up_out, Cu); row = (di*2+dj)*up_out + o.
    tw_mat = jnp.transpose(tr_w, (2, 3, 1, 0)).reshape(4 * up_out, Cu).astype(jnp.bfloat16)
    xw_mat = x_w.reshape(x_out, Cx).astype(jnp.bfloat16)
    tb_col = jnp.tile(tr_b, 4).reshape(4 * up_out, 1).astype(jnp.float32)  # bias tiled over taps
    xb_col = x_b.reshape(x_out, 1).astype(jnp.float32)

    up_spec = pl.BlockSpec((1, Cu, T_up), lambda n, g: (n, 0, g))
    x_spec = pl.BlockSpec((1, Cx, T_x), lambda n, g: (n, 0, g))
    const2 = lambda shape: pl.BlockSpec(shape, lambda n, g: (0, 0))   # resident weights/vectors
    cparams = pltpu.CompilerParams(
        dimension_semantics=("parallel", "parallel"),   # shards across both TCs on v7x
        vmem_limit_bytes=vmem_limit)

    # ---- Phase 1: per-tile partial sums / sums-of-squares -------------------------------
    psum_u_spec = pl.BlockSpec((1, 1, 4 * up_out, 1), lambda n, g: (n, g, 0, 0))
    psum_x_spec = pl.BlockSpec((1, 1, x_out, 1), lambda n, g: (n, g, 0, 0))
    s_u_p, q_u_p, s_x_p, q_x_p = pl.pallas_call(
        _stats_kernel,
        grid=(N, G),
        in_specs=[up_spec, x_spec,
                  const2((4 * up_out, Cu)), const2((4 * up_out, 1)),
                  const2((x_out, Cx)), const2((x_out, 1))],
        out_specs=[psum_u_spec, psum_u_spec, psum_x_spec, psum_x_spec],
        out_shape=[jax.ShapeDtypeStruct((N, G, 4 * up_out, 1), jnp.float32),
                   jax.ShapeDtypeStruct((N, G, 4 * up_out, 1), jnp.float32),
                   jax.ShapeDtypeStruct((N, G, x_out, 1), jnp.float32),
                   jax.ShapeDtypeStruct((N, G, x_out, 1), jnp.float32)],
        compiler_params=cparams,
    )(up3, x3, tw_mat, tb_col, xw_mat, xb_col)

    # ---- Tiny cross-tile reduction + BN scale/shift (a few hundred scalars; plain XLA) ---
    # NOTE: variance uses E[x^2]-E[x]^2 on f32 per-tile partials; per-tile accumulation keeps
    # the cancellation risk small. TODO(synk): shifted / Welford-style combination for very
    # large N*H*W if tighter variance accuracy is required.
    count = float(N * S_x)                      # elements per channel of the concatenated output
    s_u = jnp.sum(s_u_p, axis=(0, 1))[:, 0].reshape(4, up_out).sum(axis=0)   # fold taps
    q_u = jnp.sum(q_u_p, axis=(0, 1))[:, 0].reshape(4, up_out).sum(axis=0)
    s_x = jnp.sum(s_x_p, axis=(0, 1))[:, 0]
    q_x = jnp.sum(q_x_p, axis=(0, 1))[:, 0]

    mean_u = s_u / count
    var_u = jnp.maximum(q_u / count - mean_u * mean_u, 0.0)
    scale_u = gamma[:up_out] * lax.rsqrt(var_u + BN_EPS)
    shift_u = beta[:up_out] - mean_u * scale_u
    mean_x = s_x / count
    var_x = jnp.maximum(q_x / count - mean_x * mean_x, 0.0)
    scale_x = gamma[up_out:] * lax.rsqrt(var_x + BN_EPS)
    shift_x = beta[up_out:] - mean_x * scale_x

    scale_u_col = jnp.tile(scale_u, 4).reshape(4 * up_out, 1)
    shift_u_col = jnp.tile(shift_u, 4).reshape(4 * up_out, 1)
    scale_x_col = scale_x.reshape(x_out, 1)
    shift_x_col = shift_x.reshape(x_out, 1)

    # ---- Phase 2: recompute conv+bias+ReLU per tile, apply scale/shift, store bf16 -------
    out_u_spec = pl.BlockSpec((1, 4 * up_out, T_up), lambda n, g: (n, 0, g))
    out_x_spec = pl.BlockSpec((1, x_out, T_x), lambda n, g: (n, 0, g))
    out_u3, out_x3 = pl.pallas_call(
        _apply_kernel,
        grid=(N, G),
        in_specs=[up_spec, x_spec,
                  const2((4 * up_out, Cu)), const2((4 * up_out, 1)),
                  const2((x_out, Cx)), const2((x_out, 1)),
                  const2((4 * up_out, 1)), const2((4 * up_out, 1)),
                  const2((x_out, 1)), const2((x_out, 1))],
        out_specs=[out_u_spec, out_x_spec],
        out_shape=[jax.ShapeDtypeStruct((N, 4 * up_out, S_up), jnp.bfloat16),
                   jax.ShapeDtypeStruct((N, x_out, S_x), jnp.bfloat16)],
        compiler_params=cparams,
    )(up3, x3, tw_mat, tb_col, xw_mat, xb_col,
      scale_u_col, shift_u_col, scale_x_col, shift_x_col)

    # ---- De-interleave the 4 transpose-conv taps into the 2x grid and concat channels ----
    # Done on bf16 (half the bytes of the previous f32 version); the concat converts to f32.
    up_nchw = (out_u3.reshape(N, 2, 2, up_out, H, W)
               .transpose(0, 3, 4, 1, 5, 2)
               .reshape(N, up_out, H2, W2))
    x_nchw = out_x3.reshape(N, x_out, H2, W2)
    return jnp.concatenate([up_nchw.astype(jnp.float32),
                            x_nchw.astype(jnp.float32)], axis=1)   # [up | x], NCHW, f32


# ----------------------------- Reference & test harness ------------------------------------

def reference_forward(up_p, x_p, params, matmul_dtype=jnp.bfloat16):
    """Pure-JAX mirror of the PyTorch forward (NCHW). Matmul operands are rounded to the same
    dtype the kernel feeds the MXU (bf16); accumulation and all BN math stay in f32."""
    tr_w, tr_b = params["tr_w"], params["tr_b"]
    x_w, x_b = params["x_w"], params["x_b"]
    gamma, beta = params["gamma"], params["beta"]
    N, Cu, H, W = up_p.shape
    up_out = tr_w.shape[1]

    upc = up_p.astype(matmul_dtype)
    trc = tr_w.astype(matmul_dtype)
    xc = x_p.astype(matmul_dtype)
    xwc = x_w[:, :, 0, 0].astype(matmul_dtype)

    up = jnp.einsum("nchw,codk->nohdwk", upc, trc,
                    preferred_element_type=jnp.float32).reshape(N, up_out, 2 * H, 2 * W)
    up = up + tr_b[None, :, None, None]
    xp = jnp.einsum("nchw,oc->nohw", xc, xwc,
                    preferred_element_type=jnp.float32) + x_b[None, :, None, None]
    cat = jnp.concatenate([up, xp], axis=1)
    r = jnp.maximum(cat, 0.0)
    mean = jnp.mean(r, axis=(0, 2, 3), keepdims=True)
    var = jnp.mean((r - mean) ** 2, axis=(0, 2, 3), keepdims=True)   # biased, as PyTorch BN
    return ((r - mean) * lax.rsqrt(var + BN_EPS)
            * gamma[None, :, None, None] + beta[None, :, None, None])


def make_params(key, up_in, x_in, n_out):
    up_out = x_out = n_out // 2
    k1, k2, k3, k4 = jax.random.split(key, 4)
    return {
        "tr_w": 0.1 * jax.random.normal(k1, (up_in, up_out, 2, 2), jnp.float32),
        "tr_b": 0.05 * jax.random.normal(k2, (up_out,), jnp.float32),
        "x_w": 0.1 * jax.random.normal(k3, (x_out, x_in, 1, 1), jnp.float32),
        "x_b": 0.05 * jax.random.normal(k4, (x_out,), jnp.float32),
        "gamma": 1.0 + 0.1 * jnp.arange(n_out, dtype=jnp.float32),
        "beta": 0.05 * jnp.arange(n_out, dtype=jnp.float32),
    }


if __name__ == "__main__":
    key = jax.random.PRNGKey(0)
    k_up, k_x, k_p = jax.random.split(key, 3)

    N, up_in, x_in, n_out = 2, 8, 4, 8
    H = W = 8
    up_p = jax.random.normal(k_up, (N, up_in, H, W), jnp.float32)
    x_p = jax.random.normal(k_x, (N, x_in, 2 * H, 2 * W), jnp.float32)
    params = make_params(k_p, up_in, x_in, n_out)

    out = jax.block_until_ready(unet_block_forward(up_p, x_p, params))
    ref = reference_forward(up_p, x_p, params)

    assert out.shape == (N, n_out, 2 * H, 2 * W), out.shape
    # Tolerance covers bf16 MXU operands and the bf16 storage of the normalized activations.
    max_err = jnp.max(jnp.abs(out - ref))
    assert jnp.allclose(out, ref, atol=3e-2, rtol=2e-2), f"max err {max_err}"

    print("KERNEL_OK")
</pallas_src>

<mosaic_0001>
module attributes {stable_mosaic.version = 11 : i64} {
  func.func @_stats_kernel(%arg0: i32, %arg1: i32, %arg2: memref<1x8x64xf32, #tpu.memory_space<vmem>>, %arg3: memref<1x4x256xf32, #tpu.memory_space<vmem>>, %arg4: memref<16x8xbf16, #tpu.memory_space<vmem>>, %arg5: memref<16x1xf32, #tpu.memory_space<vmem>>, %arg6: memref<4x4xbf16, #tpu.memory_space<vmem>>, %arg7: memref<4x1xf32, #tpu.memory_space<vmem>>, %arg8: memref<1x1x16x1xf32, #tpu.memory_space<vmem>>, %arg9: memref<1x1x16x1xf32, #tpu.memory_space<vmem>>, %arg10: memref<1x1x4x1xf32, #tpu.memory_space<vmem>>, %arg11: memref<1x1x4x1xf32, #tpu.memory_space<vmem>>) attributes {dimension_semantics = [#tpu.dimension_semantics<parallel>, #tpu.dimension_semantics<parallel>], iteration_bounds = array<i64: 2, 1>, scalar_prefetch = 0 : i64, scratch_operands = 0 : i64, tpu.core_type = #tpu.core_type<tc>, window_params = [{transform_indices = @transform_0, window_bounds = array<i64: 1, 8, 64>}, {transform_indices = @transform_1, window_bounds = array<i64: 1, 4, 256>}, {pipeline_mode = #tpu.pipeline_mode<synchronous>, transform_indices = @transform_2, window_bounds = array<i64: 16, 8>}, {pipeline_mode = #tpu.pipeline_mode<synchronous>, transform_indices = @transform_3, window_bounds = array<i64: 16, 1>}, {pipeline_mode = #tpu.pipeline_mode<synchronous>, transform_indices = @transform_4, window_bounds = array<i64: 4, 4>}, {pipeline_mode = #tpu.pipeline_mode<synchronous>, transform_indices = @transform_5, window_bounds = array<i64: 4, 1>}, {transform_indices = @transform_6, window_bounds = array<i64: 1, 1, 16, 1>}, {transform_indices = @transform_7, window_bounds = array<i64: 1, 1, 16, 1>}, {transform_indices = @transform_8, window_bounds = array<i64: 1, 1, 4, 1>}, {transform_indices = @transform_9, window_bounds = array<i64: 1, 1, 4, 1>}]} {
    %c0 = arith.constant 0 : index
    %c0_0 = arith.constant 0 : index
    %0 = vector.load %arg4[%c0, %c0_0] : memref<16x8xbf16, #tpu.memory_space<vmem>>, vector<16x8xbf16>
    %c0_1 = arith.constant 0 : index
    %c0_2 = arith.constant 0 : index
    %c0_3 = arith.constant 0 : index
    %1 = vector.load %arg2[%c0_1, %c0_2, %c0_3] : memref<1x8x64xf32, #tpu.memory_space<vmem>>, vector<1x8x64xf32>
    %2 = vector.shape_cast %1 : vector<1x8x64xf32> to vector<8x64xf32>
    %3 = arith.truncf %2 : vector<8x64xf32> to vector<8x64xbf16>
    %cst = arith.constant dense<0.000000e+00> : vector<16x64xf32>
    %4 = tpu.matmul %0, %3, %cst {dimension_numbers = #tpu.dot_dimension_numbers<[1], [0], [0], [1], [0, 0, 1, 1], [], []>} : vector<16x8xbf16>, vector<8x64xbf16>, vector<16x64xf32> -> vector<16x64xf32>
    %c0_4 = arith.constant 0 : index
    %c0_5 = arith.constant 0 : index
    %5 = vector.load %arg5[%c0_4, %c0_5] : memref<16x1xf32, #tpu.memory_space<vmem>>, vector<16x1xf32>
    %6 = vector.broadcast %5 : vector<16x1xf32> to vector<16x64xf32>
    %7 = arith.addf %4, %6 : vector<16x64xf32>
    %cst_6 = arith.constant 0.000000e+00 : f32
    %8 = vector.broadcast %cst_6 : f32 to vector<16x64xf32>
    %9 = arith.maximumf %7, %8 : vector<16x64xf32>
    %cst_7 = arith.constant dense<0.000000e+00> : vector<16xf32>
    %10 = vector.multi_reduction <add>, %9, %cst_7 [1] : vector<16x64xf32> to vector<16xf32>
    %11 = vector.shape_cast %10 : vector<16xf32> to vector<16x1xf32>
    %c0_8 = arith.constant 0 : index
    %c0_9 = arith.constant 0 : index
    %c0_10 = arith.constant 0 : index
    %c0_11 = arith.constant 0 : index
    %12 = vector.load %arg8[%c0_8, %c0_9, %c0_10, %c0_11] : memref<1x1x16x1xf32, #tpu.memory_space<vmem>>, vector<1x1x16x1xf32>
    %13 = vector.shape_cast %12 : vector<1x1x16x1xf32> to vector<16x1xf32>
    %14 = vector.shape_cast %11 : vector<16x1xf32> to vector<1x1x16x1xf32>
    tpu.vector_store %arg8[%c0_8, %c0_9, %c0_10, %c0_11], %14 {strides = array<i32>} : memref<1x1x16x1xf32, #tpu.memory_space<vmem>>, vector<1x1x16x1xf32>,
    %15 = arith.mulf %9, %9 : vector<16x64xf32>
    %cst_12 = arith.constant dense<0.000000e+00> : vector<16xf32>
    %16 = vector.multi_reduction <add>, %15, %cst_12 [1] : vector<16x64xf32> to vector<16xf32>
    %17 = vector.shape_cast %16 : vector<16xf32> to vector<16x1xf32>
    %c0_13 = arith.constant 0 : index
    %c0_14 = arith.constant 0 : index
    %c0_15 = arith.constant 0 : index
    %c0_16 = arith.constant 0 : index
    %18 = vector.load %arg9[%c0_13, %c0_14, %c0_15, %c0_16] : memref<1x1x16x1xf32, #tpu.memory_space<vmem>>, vector<1x1x16x1xf32>
    %19 = vector.shape_cast %18 : vector<1x1x16x1xf32> to vector<16x1xf32>
    %20 = vector.shape_cast %17 : vector<16x1xf32> to vector<1x1x16x1xf32>
    tpu.vector_store %arg9[%c0_13, %c0_14, %c0_15, %c0_16], %20 {strides = array<i32>} : memref<1x1x16x1xf32, #tpu.memory_space<vmem>>, vector<1x1x16x1xf32>,
    %c0_17 = arith.constant 0 : index
    %c0_18 = arith.constant 0 : index
    %21 = vector.load %arg6[%c0_17, %c0_18] : memref<4x4xbf16, #tpu.memory_space<vmem>>, vector<4x4xbf16>
    %c0_19 = arith.constant 0 : index
    %c0_20 = arith.constant 0 : index
    %c0_21 = arith.constant 0 : index
    %22 = vector.load %arg3[%c0_19, %c0_20, %c0_21] : memref<1x4x256xf32, #tpu.memory_space<vmem>>, vector<1x4x256xf32>
    %23 = vector.shape_cast %22 : vector<1x4x256xf32> to vector<4x256xf32>
    %24 = arith.truncf %23 : vector<4x256xf32> to vector<4x256xbf16>
    %cst_22 = arith.constant dense<0.000000e+00> : vector<4x256xf32>
    %25 = tpu.matmul %21, %24, %cst_22 {dimension_numbers = #tpu.dot_dimension_numbers<[1], [0], [0], [1], [0, 0, 1, 1], [], []>} : vector<4x4xbf16>, vector<4x256xbf16>, vector<4x256xf32> -> vector<4x256xf32>
    %c0_23 = arith.constant 0 : index
    %c0_24 = arith.constant 0 : index
    %26 = vector.load %arg7[%c0_23, %c0_24] : memref<4x1xf32, #tpu.memory_space<vmem>>, vector<4x1xf32>
    %27 = vector.broadcast %26 : vector<4x1xf32> to vector<4x256xf32>
    %28 = arith.addf %25, %27 : vector<4x256xf32>
    %cst_25 = arith.constant 0.000000e+00 : f32
    %29 = vector.broadcast %cst_25 : f32 to vector<4x256xf32>
    %30 = arith.maximumf %28, %29 : vector<4x256xf32>
    %cst_26 = arith.constant dense<0.000000e+00> : vector<4xf32>
    %31 = vector.multi_reduction <add>, %30, %cst_26 [1] : vector<4x256xf32> to vector<4xf32>
    %32 = vector.shape_cast %31 : vector<4xf32> to vector<4x1xf32>
    %c0_27 = arith.constant 0 : index
    %c0_28 = arith.constant 0 : index
    %c0_29 = arith.constant 0 : index
    %c0_30 = arith.constant 0 : index
    %33 = vector.load %arg10[%c0_27, %c0_28, %c0_29, %c0_30] : memref<1x1x4x1xf32, #tpu.memory_space<vmem>>, vector<1x1x4x1xf32>
    %34 = vector.shape_cast %33 : vector<1x1x4x1xf32> to vector<4x1xf32>
    %35 = vector.shape_cast %32 : vector<4x1xf32> to vector<1x1x4x1xf32>
    tpu.vector_store %arg10[%c0_27, %c0_28, %c0_29, %c0_30], %35 {strides = array<i32>} : memref<1x1x4x1xf32, #tpu.memory_space<vmem>>, vector<1x1x4x1xf32>,
    %36 = arith.mulf %30, %30 : vector<4x256xf32>
    %cst_31 = arith.constant dense<0.000000e+00> : vector<4xf32>
    %37 = vector.multi_reduction <add>, %36, %cst_31 [1] : vector<4x256xf32> to vector<4xf32>
    %38 = vector.shape_cast %37 : vector<4xf32> to vector<4x1xf32>
    %c0_32 = arith.constant 0 : index
    %c0_33 = arith.constant 0 : index
    %c0_34 = arith.constant 0 : index
    %c0_35 = arith.constant 0 : index
    %39 = vector.load %arg11[%c0_32, %c0_33, %c0_34, %c0_35] : memref<1x1x4x1xf32, #tpu.memory_space<vmem>>, vector<1x1x4x1xf32>
    %40 = vector.shape_cast %39 : vector<1x1x4x1xf32> to vector<4x1xf32>
    %41 = vector.shape_cast %38 : vector<4x1xf32> to vector<1x1x4x1xf32>
    tpu.vector_store %arg11[%c0_32, %c0_33, %c0_34, %c0_35], %41 {strides = array<i32>} : memref<1x1x4x1xf32, #tpu.memory_space<vmem>>, vector<1x1x4x1xf32>,
    return
  }
  func.func @transform_0(%arg0: i32, %arg1: i32) -> (i32, i32, i32) {
    %c0_i32 = arith.constant 0 : i32
    %c0_i32_0 = arith.constant 0 : i32
    return %arg0, %c0_i32, %arg1 : i32, i32, i32
  }
  func.func @transform_1(%arg0: i32, %arg1: i32) -> (i32, i32, i32) {
    %c0_i32 = arith.constant 0 : i32
    %c0_i32_0 = arith.constant 0 : i32
    return %arg0, %c0_i32, %arg1 : i32, i32, i32
  }
  func.func @transform_2(%arg0: i32, %arg1: i32) -> (i32, i32) {
    %c0_i32 = arith.constant 0 : i32
    %c0_i32_0 = arith.constant 0 : i32
    %c0_i32_1 = arith.constant 0 : i32
    return %c0_i32, %c0_i32_0 : i32, i32
  }
  func.func @transform_3(%arg0: i32, %arg1: i32) -> (i32, i32) {
    %c0_i32 = arith.constant 0 : i32
    %c0_i32_0 = arith.constant 0 : i32
    %c0_i32_1 = arith.constant 0 : i32
    return %c0_i32, %c0_i32_0 : i32, i32
  }
  func.func @transform_4(%arg0: i32, %arg1: i32) -> (i32, i32) {
    %c0_i32 = arith.constant 0 : i32
    %c0_i32_0 = arith.constant 0 : i32
    %c0_i32_1 = arith.constant 0 : i32
    return %c0_i32, %c0_i32_0 : i32, i32
  }
  func.func @transform_5(%arg0: i32, %arg1: i32) -> (i32, i32) {
    %c0_i32 = arith.constant 0 : i32
    %c0_i32_0 = arith.constant 0 : i32
    %c0_i32_1 = arith.constant 0 : i32
    return %c0_i32, %c0_i32_0 : i32, i32
  }
  func.func @transform_6(%arg0: i32, %arg1: i32) -> (i32, i32, i32, i32) {
    %c0_i32 = arith.constant 0 : i32
    %c0_i32_0 = arith.constant 0 : i32
    %c0_i32_1 = arith.constant 0 : i32
    return %arg0, %arg1, %c0_i32, %c0_i32_0 : i32, i32, i32, i32
  }
  func.func @transform_7(%arg0: i32, %arg1: i32) -> (i32, i32, i32, i32) {
    %c0_i32 = arith.constant 0 : i32
    %c0_i32_0 = arith.constant 0 : i32
    %c0_i32_1 = arith.constant 0 : i32
    return %arg0, %arg1, %c0_i32, %c0_i32_0 : i32, i32, i32, i32
  }
  func.func @transform_8(%arg0: i32, %arg1: i32) -> (i32, i32, i32, i32) {
    %c0_i32 = arith.constant 0 : i32
    %c0_i32_0 = arith.constant 0 : i32
    %c0_i32_1 = arith.constant 0 : i32
    return %arg0, %arg1, %c0_i32, %c0_i32_0 : i32, i32, i32, i32
  }
  func.func @transform_9(%arg0: i32, %arg1: i32) -> (i32, i32, i32, i32) {
    %c0_i32 = arith.constant 0 : i32
    %c0_i32_0 = arith.constant 0 : i32
    %c0_i32_1 = arith.constant 0 : i32
    return %arg0, %arg1, %c0_i32, %c0_i32_0 : i32, i32, i32, i32
  }
}

module attributes {stable_mosaic.version = 11 : i64} {
  func.func @_apply_kernel(%arg0: i32, %arg1: i32, %arg2: memref<1x8x64xf32, #tpu.memory_space<vmem>>, %arg3: memref<1x4x256xf32, #tpu.memory_space<vmem>>, %arg4: memref<16x8xbf16, #tpu.memory_space<vmem>>, %arg5: memref<16x1xf32, #tpu.memory_space<vmem>>, %arg6: memref<4x4xbf16, #tpu.memory_space<vmem>>, %arg7: memref<4x1xf32, #tpu.memory_space<vmem>>, %arg8: memref<16x1xf32, #tpu.memory_space<vmem>>, %arg9: memref<16x1xf32, #tpu.memory_space<vmem>>, %arg10: memref<4x1xf32, #tpu.memory_space<vmem>>, %arg11: memref<4x1xf32, #tpu.memory_space<vmem>>, %arg12: memref<1x16x64xbf16, #tpu.memory_space<vmem>>, %arg13: memref<1x4x256xbf16, #tpu.memory_space<vmem>>) attributes {dimension_semantics = [#tpu.dimension_semantics<parallel>, #tpu.dimension_semantics<parallel>], iteration_bounds = array<i64: 2, 1>, scalar_prefetch = 0 : i64, scratch_operands = 0 : i64, tpu.core_type = #tpu.core_type<tc>, window_params = [{transform_indices = @transform_0, window_bounds = array<i64: 1, 8, 64>}, {transform_indices = @transform_1, window_bounds = array<i64: 1, 4, 256>}, {pipeline_mode = #tpu.pipeline_mode<synchronous>, transform_indices = @transform_2, window_bounds = array<i64: 16, 8>}, {pipeline_mode = #tpu.pipeline_mode<synchronous>, transform_indices = @transform_3, window_bounds = array<i64: 16, 1>}, {pipeline_mode = #tpu.pipeline_mode<synchronous>, transform_indices = @transform_4, window_bounds = array<i64: 4, 4>}, {pipeline_mode = #tpu.pipeline_mode<synchronous>, transform_indices = @transform_5, window_bounds = array<i64: 4, 1>}, {pipeline_mode = #tpu.pipeline_mode<synchronous>, transform_indices = @transform_6, window_bounds = array<i64: 16, 1>}, {pipeline_mode = #tpu.pipeline_mode<synchronous>, transform_indices = @transform_7, window_bounds = array<i64: 16, 1>}, {pipeline_mode = #tpu.pipeline_mode<synchronous>, transform_indices = @transform_8, window_bounds = array<i64: 4, 1>}, {pipeline_mode = #tpu.pipeline_mode<synchronous>, transform_indices = @transform_9, window_bounds = array<i64: 4, 1>}, {transform_indices = @transform_10, window_bounds = array<i64: 1, 16, 64>}, {transform_indices = @transform_11, window_bounds = array<i64: 1, 4, 256>}]} {
    %c0 = arith.constant 0 : index
    %c0_0 = arith.constant 0 : index
    %0 = vector.load %arg4[%c0, %c0_0] : memref<16x8xbf16, #tpu.memory_space<vmem>>, vector<16x8xbf16>
    %c0_1 = arith.constant 0 : index
    %c0_2 = arith.constant 0 : index
    %c0_3 = arith.constant 0 : index
    %1 = vector.load %arg2[%c0_1, %c0_2, %c0_3] : memref<1x8x64xf32, #tpu.memory_space<vmem>>, vector<1x8x64xf32>
    %2 = vector.shape_cast %1 : vector<1x8x64xf32> to vector<8x64xf32>
    %3 = arith.truncf %2 : vector<8x64xf32> to vector<8x64xbf16>
    %cst = arith.constant dense<0.000000e+00> : vector<16x64xf32>
    %4 = tpu.matmul %0, %3, %cst {dimension_numbers = #tpu.dot_dimension_numbers<[1], [0], [0], [1], [0, 0, 1, 1], [], []>} : vector<16x8xbf16>, vector<8x64xbf16>, vector<16x64xf32> -> vector<16x64xf32>
    %c0_4 = arith.constant 0 : index
    %c0_5 = arith.constant 0 : index
    %5 = vector.load %arg5[%c0_4, %c0_5] : memref<16x1xf32, #tpu.memory_space<vmem>>, vector<16x1xf32>
    %6 = vector.broadcast %5 : vector<16x1xf32> to vector<16x64xf32>
    %7 = arith.addf %4, %6 : vector<16x64xf32>
    %cst_6 = arith.constant 0.000000e+00 : f32
    %8 = vector.broadcast %cst_6 : f32 to vector<16x64xf32>
    %9 = arith.maximumf %7, %8 : vector<16x64xf32>
    %c0_7 = arith.constant 0 : index
    %c0_8 = arith.constant 0 : index
    %10 = vector.load %arg8[%c0_7, %c0_8] : memref<16x1xf32, #tpu.memory_space<vmem>>, vector<16x1xf32>
    %11 = vector.broadcast %10 : vector<16x1xf32> to vector<16x64xf32>
    %12 = arith.mulf %9, %11 : vector<16x64xf32>
    %c0_9 = arith.constant 0 : index
    %c0_10 = arith.constant 0 : index
    %13 = vector.load %arg9[%c0_9, %c0_10] : memref<16x1xf32, #tpu.memory_space<vmem>>, vector<16x1xf32>
    %14 = vector.broadcast %13 : vector<16x1xf32> to vector<16x64xf32>
    %15 = arith.addf %12, %14 : vector<16x64xf32>
    %16 = arith.truncf %15 : vector<16x64xf32> to vector<16x64xbf16>
    %c0_11 = arith.constant 0 : index
    %c0_12 = arith.constant 0 : index
    %c0_13 = arith.constant 0 : index
    %17 = vector.load %arg12[%c0_11, %c0_12, %c0_13] : memref<1x16x64xbf16, #tpu.memory_space<vmem>>, vector<1x16x64xbf16>
    %18 = vector.shape_cast %17 : vector<1x16x64xbf16> to vector<16x64xbf16>
    %19 = vector.shape_cast %16 : vector<16x64xbf16> to vector<1x16x64xbf16>
    tpu.vector_store %arg12[%c0_11, %c0_12, %c0_13], %19 {strides = array<i32>} : memref<1x16x64xbf16, #tpu.memory_space<vmem>>, vector<1x16x64xbf16>,
    %c0_14 = arith.constant 0 : index
    %c0_15 = arith.constant 0 : index
    %20 = vector.load %arg6[%c0_14, %c0_15] : memref<4x4xbf16, #tpu.memory_space<vmem>>, vector<4x4xbf16>
    %c0_16 = arith.constant 0 : index
    %c0_17 = arith.constant 0 : index
    %c0_18 = arith.constant 0 : index
    %21 = vector.load %arg3[%c0_16, %c0_17, %c0_18] : memref<1x4x256xf32, #tpu.memory_space<vmem>>, vector<1x4x256xf32>
    %22 = vector.shape_cast %21 : vector<1x4x256xf32> to vector<4x256xf32>
    %23 = arith.truncf %22 : vector<4x256xf32> to vector<4x256xbf16>
    %cst_19 = arith.constant dense<0.000000e+00> : vector<4x256xf32>
    %24 = tpu.matmul %20, %23, %cst_19 {dimension_numbers = #tpu.dot_dimension_numbers<[1], [0], [0], [1], [0, 0, 1, 1], [], []>} : vector<4x4xbf16>, vector<4x256xbf16>, vector<4x256xf32> -> vector<4x256xf32>
    %c0_20 = arith.constant 0 : index
    %c0_21 = arith.constant 0 : index
    %25 = vector.load %arg7[%c0_20, %c0_21] : memref<4x1xf32, #tpu.memory_space<vmem>>, vector<4x1xf32>
    %26 = vector.broadcast %25 : vector<4x1xf32> to vector<4x256xf32>
    %27 = arith.addf %24, %26 : vector<4x256xf32>
    %cst_22 = arith.constant 0.000000e+00 : f32
    %28 = vector.broadcast %cst_22 : f32 to vector<4x256xf32>
    %29 = arith.maximumf %27, %28 : vector<4x256xf32>
    %c0_23 = arith.constant 0 : index
    %c0_24 = arith.constant 0 : index
    %30 = vector.load %arg10[%c0_23, %c0_24] : memref<4x1xf32, #tpu.memory_space<vmem>>, vector<4x1xf32>
    %31 = vector.broadcast %30 : vector<4x1xf32> to vector<4x256xf32>
    %32 = arith.mulf %29, %31 : vector<4x256xf32>
    %c0_25 = arith.constant 0 : index
    %c0_26 = arith.constant 0 : index
    %33 = vector.load %arg11[%c0_25, %c0_26] : memref<4x1xf32, #tpu.memory_space<vmem>>, vector<4x1xf32>
    %34 = vector.broadcast %33 : vector<4x1xf32> to vector<4x256xf32>
    %35 = arith.addf %32, %34 : vector<4x256xf32>
    %36 = arith.truncf %35 : vector<4x256xf32> to vector<4x256xbf16>
    %c0_27 = arith.constant 0 : index
    %c0_28 = arith.constant 0 : index
    %c0_29 = arith.constant 0 : index
    %37 = vector.load %arg13[%c0_27, %c0_28, %c0_29] : memref<1x4x256xbf16, #tpu.memory_space<vmem>>, vector<1x4x256xbf16>
    %38 = vector.shape_cast %37 : vector<1x4x256xbf16> to vector<4x256xbf16>
    %39 = vector.shape_cast %36 : vector<4x256xbf16> to vector<1x4x256xbf16>
    tpu.vector_store %arg13[%c0_27, %c0_28, %c0_29], %39 {strides = array<i32>} : memref<1x4x256xbf16, #tpu.memory_space<vmem>>, vector<1x4x256xbf16>,
    return
  }
  func.func @transform_0(%arg0: i32, %arg1: i32) -> (i32, i32, i32) {
    %c0_i32 = arith.constant 0 : i32
    %c0_i32_0 = arith.constant 0 : i32
    return %arg0, %c0_i32, %arg1 : i32, i32, i32
  }
  func.func @transform_1(%arg0: i32, %arg1: i32) -> (i32, i32, i32) {
    %c0_i32 = arith.constant 0 : i32
    %c0_i32_0 = arith.constant 0 : i32
    return %arg0, %c0_i32, %arg1 : i32, i32, i32
  }
  func.func @transform_2(%arg0: i32, %arg1: i32) -> (i32, i32) {
    %c0_i32 = arith.constant 0 : i32
    %c0_i32_0 = arith.constant 0 : i32
    %c0_i32_1 = arith.constant 0 : i32
    return %c0_i32, %c0_i32_0 : i32, i32
  }
  func.func @transform_3(%arg0: i32, %arg1: i32) -> (i32, i32) {
    %c0_i32 = arith.constant 0 : i32
    %c0_i32_0 = arith.constant 0 : i32
    %c0_i32_1 = arith.constant 0 : i32
    return %c0_i32, %c0_i32_0 : i32, i32
  }
  func.func @transform_4(%arg0: i32, %arg1: i32) -> (i32, i32) {
    %c0_i32 = arith.constant 0 : i32
    %c0_i32_0 = arith.constant 0 : i32
    %c0_i32_1 = arith.constant 0 : i32
    return %c0_i32, %c0_i32_0 : i32, i32
  }
  func.func @transform_5(%arg0: i32, %arg1: i32) -> (i32, i32) {
    %c0_i32 = arith.constant 0 : i32
    %c0_i32_0 = arith.constant 0 : i32
    %c0_i32_1 = arith.constant 0 : i32
    return %c0_i32, %c0_i32_0 : i32, i32
  }
  func.func @transform_6(%arg0: i32, %arg1: i32) -> (i32, i32) {
    %c0_i32 = arith.constant 0 : i32
    %c0_i32_0 = arith.constant 0 : i32
    %c0_i32_1 = arith.constant 0 : i32
    return %c0_i32, %c0_i32_0 : i32, i32
  }
  func.func @transform_7(%arg0: i32, %arg1: i32) -> (i32, i32) {
    %c0_i32 = arith.constant 0 : i32
    %c0_i32_0 = arith.constant 0 : i32
    %c0_i32_1 = arith.constant 0 : i32
    return %c0_i32, %c0_i32_0 : i32, i32
  }
  func.func @transform_8(%arg0: i32, %arg1: i32) -> (i32, i32) {
    %c0_i32 = arith.constant 0 : i32
    %c0_i32_0 = arith.constant 0 : i32
    %c0_i32_1 = arith.constant 0 : i32
    return %c0_i32, %c0_i32_0 : i32, i32
  }
  func.func @transform_9(%arg0: i32, %arg1: i32) -> (i32, i32) {
    %c0_i32 = arith.constant 0 : i32
    %c0_i32_0 = arith.constant 0 : i32
    %c0_i32_1 = arith.constant 0 : i32
    return %c0_i32, %c0_i32_0 : i32, i32
  }
  func.func @transform_10(%arg0: i32, %arg1: i32) -> (i32, i32, i32) {
    %c0_i32 = arith.constant 0 : i32
    %c0_i32_0 = arith.constant 0 : i32
    return %arg0, %c0_i32, %arg1 : i32, i32, i32
  }
  func.func @transform_11(%arg0: i32, %arg1: i32) -> (i32, i32, i32) {
    %c0_i32 = arith.constant 0 : i32
    %c0_i32_0 = arith.constant 0 : i32
    return %arg0, %c0_i32, %arg1 : i32, i32, i32
  }
}

</mosaic_0001>

<llo_original>
// kernel: tile.18
$region0: #{tile.18}
  #allocation0 [shape = 's32[1]{0}', space=sflag, size = 0x4, scoped, tag = 'scoped memory for tile.18']
  %s0 = inlined_call_operand.vmem [shape: f32[4], index: 0, kind: input, shape index: {}]
  %s1 = inlined_call_operand.vmem [shape: f32[4,4], index: 1, kind: output, shape index: {}]
  // Predicated region
  $region2: #{tile.18} parent=0 // pred_check
    _
  $region3: #{tile.18} parent=0 // pred_check_branch
    %3 = sbr.rel (0) target = $region5
  $region4: #{tile.18} parent=0 // pred_region
    _
  $region5: #{tile.18} parent=0 // pred_fallthru
    _
  %v4 = vld [vmem:[%s0] ss:$0 sm:$0xff]
  %5 = vst [vmem:[%s1] sm:$0xf] %v4

// kernel: tile.0
$region0: #{tile.0}
  %s0 = inlined_call_operand.vmem [shape: f32[4,4], index: 0, kind: input, shape index: {}]
  %s1 = inlined_call_operand.vmem [shape: f32[16,1], index: 1, kind: output, shape index: {}]
  $region1: #{tile.0} parent=0
    #allocation0 [shape = 'u8[4096]{0}', space=vmem, size = 0x1000, scoped, tag = 'scoped mem for input reshape']
    %s3 = sshll.u32 1, 4
    %s4 = ssub.s32 %s3, 1
    %v5 = vld [vmem:[%s0] sm:%s4]
    %6 = vst [vmem:[#allocation0] sm:%s4] %v5
    %v7 = vld [vmem:[#allocation0] sm:$0xf]
    %vm8 = vcmask 7168
    %9 = vst.msk [vmem:[%s1] ss:$4 sm:$0xf] %vm8, %v7
    %v10 = vld [vmem:[#allocation0] sm:$0xf]
    %11 = vrot.lane.b32.xlu0 %v10, 127
    %v12 = vpop.permute.xlu0 %11
    %vm13 = vcmask 7168
    %s14 = scalar_lea.vmem %s1, 1
    %15 = vst.msk [vmem:[%s14] ss:$4 sm:$0xf] %vm13, %v12
    %v16 = vld [vmem:[#allocation0] sm:$0xf]
    %17 = vrot.lane.b32.xlu0 %v16, 126
    %v18 = vpop.permute.xlu0 %17
    %vm19 = vcmask 7168
    %s20 = scalar_lea.vmem %s1, 2
    %21 = vst.msk [vmem:[%s20] ss:$4 sm:$0xf] %vm19, %v18
    %v22 = vld [vmem:[#allocation0] sm:$0xf]
    %23 = vrot.lane.b32.xlu0 %v22, 125
    %v24 = vpop.permute.xlu0 %23
    %vm25 = vcmask 7168
    %s26 = scalar_lea.vmem %s1, 3
    %27 = vst.msk [vmem:[%s26] ss:$4 sm:$0xf] %vm25, %v24

// kernel: squeeze.4
$region0: #{squeeze.4}
  %s0 = inlined_call_operand.vmem [shape: f32[16], index: 0, kind: input, shape index: {}]
  %s1 = inlined_call_operand.vmem [shape: f32[4,4], index: 1, kind: output, shape index: {}]
  $region1: #{squeeze.4} parent=0
    #allocation0 [shape = 'u8[4096]{0}', space=vmem, size = 0x1000, scoped, tag = 'scoped mem for output reshape']
    #allocation1 [shape = 'u8[4096]{0}', space=vmem, size = 0x1000, scoped, tag = 'scoped mem for input reshape']
    %s3 = sshll.u32 1, 1
    %s4 = ssub.s32 %s3, 1
    %v5 = vld [vmem:[%s0] sm:%s4]
    %6 = vst [vmem:[#allocation1] sm:%s4] %v5
    %v7 = vld [vmem:[#allocation1] sm:$0x1]
    %vm8 = vcmask 31744
    %9 = vst.msk [vmem:[#allocation0] sm:$0x1] %vm8, %v7
    %v10 = vld [vmem:[#allocation1] sm:$0x1]
    %11 = vrot.lane.b32.xlu0 %v10, 124
    %v12 = vpop.permute.xlu0 %11
    %vm13 = vcmask 31744
    %s14 = scalar_lea.vmem [#allocation0], 1
    %15 = vst.msk [vmem:[%s14] sm:$0x1] %vm13, %v12
    %v16 = vld [vmem:[#allocation1] sm:$0x1]
    %17 = vrot.lane.b32.xlu0 %v16, 120
    %v18 = vpop.permute.xlu0 %17
    %vm19 = vcmask 31744
    %s20 = scalar_lea.vmem [#allocation0], 2
    %21 = vst.msk [vmem:[%s20] sm:$0x1] %vm19, %v18
    %v22 = vld [vmem:[#allocation1] sm:$0x1]
    %23 = vrot.lane.b32.xlu0 %v22, 116
    %v24 = vpop.permute.xlu0 %23
    %vm25 = vcmask 31744
    %s26 = scalar_lea.vmem [#allocation0], 3
    %27 = vst.msk [vmem:[%s26] sm:$0x1] %vm25, %v24
    %s29 = sshll.u32 1, 4
    %s30 = ssub.s32 %s29, 1
    %v32 = vld [vmem:[#allocation0] sm:%s30]
    %s33 = sshll.u32 1, 4
    %s34 = ssub.s32 %s33, 1
    %35 = vst [vmem:[%s1] sm:%s34] %v32

// kernel: unet_block_forward.3
$region0: #{unet_block_forward.3}
  #allocation0 [shape = 'u32[]', space=smem, size = 0x4, offset = 0x4, fixed_abs, tag = 'smem constant byte address 0x4 - core index']
  #allocation1 [shape = 'u32[144,128]{1,0:T(1,128)}', space=vmem, size = 0x12000, scoped, tag = 'internal scratch']
  %s0 = inlined_call_operand.vmem [shape: f32[2,8,64], index: 0, kind: input, shape index: {}]
  %s1 = inlined_call_operand.vmem [shape: f32[2,4,256], index: 1, kind: input, shape index: {}]
  %s2 = inlined_call_operand.vmem [shape: bf16[16,8], index: 2, kind: input, shape index: {}]
  %s3 = inlined_call_operand.vmem [shape: f32[16,1], index: 3, kind: input, shape index: {}]
  %s4 = inlined_call_operand.vmem [shape: bf16[4,4], index: 4, kind: input, shape index: {}]
  %s5 = inlined_call_operand.vmem [shape: f32[4,1], index: 5, kind: input, shape index: {}]
  %s6 = inlined_call_operand.vmem [shape: f32[16,1], index: 6, kind: input, shape index: {}]
  %s7 = inlined_call_operand.vmem [shape: f32[16,1], index: 7, kind: input, shape index: {}]
  %s8 = inlined_call_operand.vmem [shape: f32[4,1], index: 8, kind: input, shape index: {}]
  %s9 = inlined_call_operand.vmem [shape: f32[4,1], index: 9, kind: input, shape index: {}]
  %s10 = inlined_call_operand.vmem [shape: bf16[2,16,64], index: 10, kind: output, shape index: {0}]
  %s11 = inlined_call_operand.vmem [shape: bf16[2,4,256], index: 11, kind: output, shape index: {1}]
  %12 = xla_tuple %s10, %s11
  %s13 = sld [smem:[#allocation0]]
  $region81: #{unet_block_forward.3} parent=0
    _
  %s15 = ssub.s32 1, %s13
  %s16 = scalar_select 0, %s15, %s13
  loop: start=0, step=1, limit=4
  $region2: #{unet_block_forward.3} parent=0 // loop_pre_header
    _
  $region3: #{unet_block_forward.3} parent=0 // loop_header
    %s18 = sphi 0, %s22
    %p19 = scmp.ge.s32.totalorder %s18, 4
    %s25 = sphi 0, %s37
    %s26 = sphi 0, %s33
    %s27 = sphi 0, %s25
    %s28 = sphi 0, %s26
    %s29 = sphi 0, %s27
    %s30 = sphi 0, %s28
    %s42 = sphi 0, %s44
    %s45 = sphi 0, %s42
    %s46 = sphi 0, %s45
    %s62 = sphi 0, %s46
    %s70 = sphi 0, %s72
    %s73 = sphi 0, %s70
    %s74 = sphi 0, %s73
    %s90 = sphi 0, %s74
    %s94 = sphi 0, %s94
    %s96 = sphi 0, %s94
    %s97 = sphi 0, %s96
    %s111 = sphi 0, %s97
    %s115 = sphi 0, %s115
    %s117 = sphi 0, %s115
    %s118 = sphi 0, %s117
    %s132 = sphi 0, %s118
    %s136 = sphi 0, %s136
    %s138 = sphi 0, %s136
    %s139 = sphi 0, %s138
    %s153 = sphi 0, %s139
    %s157 = sphi 0, %s157
    %s159 = sphi 0, %s157
    %s160 = sphi 0, %s159
    %s174 = sphi 0, %s160
    %s178 = sphi 0, %s178
    %s180 = sphi 0, %s178
    %s181 = sphi 0, %s180
    %s195 = sphi 0, %s181
    %s199 = sphi 0, %s199
    %s201 = sphi 0, %s199
    %s202 = sphi 0, %s201
    %s216 = sphi 0, %s202
    %s220 = sphi 0, %s220
    %s222 = sphi 0, %s220
    %s223 = sphi 0, %s222
    %s237 = sphi 0, %s223
    %s241 = sphi 0, %s241
    %s243 = sphi 0, %s241
    %s244 = sphi 0, %s243
    %s258 = sphi 0, %s244
    %s266 = sphi 0, %s268
    %s269 = sphi 0, %s266
    %s270 = sphi 0, %s269
    %s286 = sphi 0, %s270
    %s294 = sphi 0, %s296
    %s297 = sphi 0, %s294
    %s298 = sphi 0, %s297
    %s314 = sphi 0, %s298
  $region4: #{unet_block_forward.3} parent=0 // loop_header_branch
    %21 = sbr.rel (%p19) target = $region8
  $region5: #{unet_block_forward.3} parent=0 // loop_body
    %s23 = ssub.s32 %s18, 1
    %s24 = ssub.s32 %s18, 2
    %s31 = sadd.s32 1, %s26
    %p32 = scmp.ge.s32.totalorder %s31, 1
    %s33 = scalar_select %p32, 0, %s31
    %s34 = sadd.s32 1, %s25
    %s35 = scalar_select %p32, %s34, %s25
    %p36 = scmp.ge.s32.totalorder %s35, 2
    %s37 = scalar_select %p36, 0, %s35
    %s38 = ssub.s32 %s25, %s37
    %s39 = ssub.s32 %s26, %s33
    %s40 = sor.u32 %s38, %s39
    %p41 = scmp.eq.s32.totalorder %s40, 0
    %s43 = sadd.s32 %s42, 1
    %s44 = scalar_select %p41, %s42, %s43
    %p47 = pneg %p41
    %p48 = scmp.eq.s32.totalorder %s18, 1
    %p49 = por %p47, %p48
    %p50 = scmp.ne.s32.totalorder %s42, %s45
    %p51 = scmp.eq.s32.totalorder %s18, 0
    %p52 = por %p50, %p51
    %p53 = scmp.ne.s32.totalorder %s42, %s45
    %p54 = scmp.eq.s32.totalorder %s23, 1
    %p55 = por %p53, %p54
    %p56 = scmp.ne.s32.totalorder %s45, %s46
    %p57 = scmp.eq.s32.totalorder %s23, 0
    %p58 = por %p56, %p57
    %p59 = scmp.ne.s32.totalorder %s45, %s46
    %p60 = scmp.eq.s32.totalorder %s24, 1
    %p61 = por %p59, %p60
    %p63 = scmp.ne.s32.totalorder %s46, %s62
    %p64 = scmp.eq.s32.totalorder %s24, 0
    %p65 = por %p63, %p64
    %s66 = ssub.s32 %s25, %s37
    %s67 = ssub.s32 %s26, %s33
    %s68 = sor.u32 %s66, %s67
    %p69 = scmp.eq.s32.totalorder %s68, 0
    %s71 = sadd.s32 %s70, 1
    %s72 = scalar_select %p69, %s70, %s71
    %p75 = pneg %p69
    %p76 = scmp.eq.s32.totalorder %s18, 1
    %p77 = por %p75, %p76
    %p78 = scmp.ne.s32.totalorder %s70, %s73
    %p79 = scmp.eq.s32.totalorder %s18, 0
    %p80 = por %p78, %p79
    %p81 = scmp.ne.s32.totalorder %s70, %s73
    %p82 = scmp.eq.s32.totalorder %s23, 1
    %p83 = por %p81, %p82
    %p84 = scmp.ne.s32.totalorder %s73, %s74
    %p85 = scmp.eq.s32.totalorder %s23, 0
    %p86 = por %p84, %p85
    %p87 = scmp.ne.s32.totalorder %s73, %s74
    %p88 = scmp.eq.s32.totalorder %s24, 1
    %p89 = por %p87, %p88
    %p91 = scmp.ne.s32.totalorder %s74, %s90
    %p92 = scmp.eq.s32.totalorder %s24, 0
    %p93 = por %p91, %p92
    %s95 = sadd.s32 %s94, 1
    %p98 = scmp.eq.s32.totalorder %s18, 1
    %p99 = scmp.ne.s32.totalorder %s94, %s96
    %p100 = scmp.eq.s32.totalorder %s18, 0
    %p101 = por %p99, %p100
    %p102 = scmp.ne.s32.totalorder %s94, %s96
    %p103 = scmp.eq.s32.totalorder %s23, 1
    %p104 = por %p102, %p103
    %p105 = scmp.ne.s32.totalorder %s96, %s97
    %p106 = scmp.eq.s32.totalorder %s23, 0
    %p107 = por %p105, %p106
    %p108 = scmp.ne.s32.totalorder %s96, %s97
    %p109 = scmp.eq.s32.totalorder %s24, 1
    %p110 = por %p108, %p109
    %p112 = scmp.ne.s32.totalorder %s97, %s111
    %p113 = scmp.eq.s32.totalorder %s24, 0
    %p114 = por %p112, %p113
    %s116 = sadd.s32 %s115, 1
    %p119 = scmp.eq.s32.totalorder %s18, 1
    %p120 = scmp.ne.s32.totalorder %s115, %s117
    %p121 = scmp.eq.s32.totalorder %s18, 0
    %p122 = por %p120, %p121
    %p123 = scmp.ne.s32.totalorder %s115, %s117
    %p124 = scmp.eq.s32.totalorder %s23, 1
    %p125 = por %p123, %p124
    %p126 = scmp.ne.s32.totalorder %s117, %s118
    %p127 = scmp.eq.s32.totalorder %s23, 0
    %p128 = por %p126, %p127
    %p129 = scmp.ne.s32.totalorder %s117, %s118
    %p130 = scmp.eq.s32.totalorder %s24, 1
    %p131 = por %p129, %p130
    %p133 = scmp.ne.s32.totalorder %s118, %s132
    %p134 = scmp.eq.s32.totalorder %s24, 0
    %p135 = por %p133, %p134
    %s137 = sadd.s32 %s136, 1
    %p140 = scmp.eq.s32.totalorder %s18, 1
    %p141 = scmp.ne.s32.totalorder %s136, %s138
    %p142 = scmp.eq.s32.totalorder %s18, 0
    %p143 = por %p141, %p142
    %p144 = scmp.ne.s32.totalorder %s136, %s138
    %p145 = scmp.eq.s32.totalorder %s23, 1
    %p146 = por %p144, %p145
    %p147 = scmp.ne.s32.totalorder %s138, %s139
    %p148 = scmp.eq.s32.totalorder %s23, 0
    %p149 = por %p147, %p148
    %p150 = scmp.ne.s32.totalorder %s138, %s139
    %p151 = scmp.eq.s32.totalorder %s24, 1
    %p152 = por %p150, %p151
    %p154 = scmp.ne.s32.totalorder %s139, %s153
    %p155 = scmp.eq.s32.totalorder %s24, 0
    %p156 = por %p154, %p155
    %s158 = sadd.s32 %s157, 1
    %p161 = scmp.eq.s32.totalorder %s18, 1
    %p162 = scmp.ne.s32.totalorder %s157, %s159
    %p163 = scmp.eq.s32.totalorder %s18, 0
    %p164 = por %p162, %p163
    %p165 = scmp.ne.s32.totalorder %s157, %s159
    %p166 = scmp.eq.s32.totalorder %s23, 1
    %p167 = por %p165, %p166
    %p168 = scmp.ne.s32.totalorder %s159, %s160
    %p169 = scmp.eq.s32.totalorder %s23, 0
    %p170 = por %p168, %p169
    %p171 = scmp.ne.s32.totalorder %s159, %s160
    %p172 = scmp.eq.s32.totalorder %s24, 1
    %p173 = por %p171, %p172
    %p175 = scmp.ne.s32.totalorder %s160, %s174
    %p176 = scmp.eq.s32.totalorder %s24, 0
    %p177 = por %p175, %p176
    %s179 = sadd.s32 %s178, 1
    %p182 = scmp.eq.s32.totalorder %s18, 1
    %p183 = scmp.ne.s32.totalorder %s178, %s180
    %p184 = scmp.eq.s32.totalorder %s18, 0
    %p185 = por %p183, %p184
    %p186 = scmp.ne.s32.totalorder %s178, %s180
    %p187 = scmp.eq.s32.totalorder %s23, 1
    %p188 = por %p186, %p187
    %p189 = scmp.ne.s32.totalorder %s180, %s181
    %p190 = scmp.eq.s32.totalorder %s23, 0
    %p191 = por %p189, %p190
    %p192 = scmp.ne.s32.totalorder %s180, %s181
    %p193 = scmp.eq.s32.totalorder %s24, 1
    %p194 = por %p192, %p193
    %p196 = scmp.ne.s32.totalorder %s181, %s195
    %p197 = scmp.eq.s32.totalorder %s24, 0
    %p198 = por %p196, %p197
    %s200 = sadd.s32 %s199, 1
    %p203 = scmp.eq.s32.totalorder %s18, 1
    %p204 = scmp.ne.s32.totalorder %s199, %s201
    %p205 = scmp.eq.s32.totalorder %s18, 0
    %p206 = por %p204, %p205
    %p207 = scmp.ne.s32.totalorder %s199, %s201
    %p208 = scmp.eq.s32.totalorder %s23, 1
    %p209 = por %p207, %p208
    %p210 = scmp.ne.s32.totalorder %s201, %s202
    %p211 = scmp.eq.s32.totalorder %s23, 0
    %p212 = por %p210, %p211
    %p213 = scmp.ne.s32.totalorder %s201, %s202
    %p214 = scmp.eq.s32.totalorder %s24, 1
    %p215 = por %p213, %p214
    %p217 = scmp.ne.s32.totalorder %s202, %s216
    %p218 = scmp.eq.s32.totalorder %s24, 0
    %p219 = por %p217, %p218
    %s221 = sadd.s32 %s220, 1
    %p224 = scmp.eq.s32.totalorder %s18, 1
    %p225 = scmp.ne.s32.totalorder %s220, %s222
    %p226 = scmp.eq.s32.totalorder %s18, 0
    %p227 = por %p225, %p226
    %p228 = scmp.ne.s32.totalorder %s220, %s222
    %p229 = scmp.eq.s32.totalorder %s23, 1
    %p230 = por %p228, %p229
    %p231 = scmp.ne.s32.totalorder %s222, %s223
    %p232 = scmp.eq.s32.totalorder %s23, 0
    %p233 = por %p231, %p232
    %p234 = scmp.ne.s32.totalorder %s222, %s223
    %p235 = scmp.eq.s32.totalorder %s24, 1
    %p236 = por %p234, %p235
    %p238 = scmp.ne.s32.totalorder %s223, %s237
    %p239 = scmp.eq.s32.totalorder %s24, 0
    %p240 = por %p238, %p239
    %s242 = sadd.s32 %s241, 1
    %p245 = scmp.eq.s32.totalorder %s18, 1
    %p246 = scmp.ne.s32.totalorder %s241, %s243
    %p247 = scmp.eq.s32.totalorder %s18, 0
    %p248 = por %p246, %p247
    %p249 = scmp.ne.s32.totalorder %s241, %s243
    %p250 = scmp.eq.s32.totalorder %s23, 1
    %p251 = por %p249, %p250
    %p252 = scmp.ne.s32.totalorder %s243, %s244
    %p253 = scmp.eq.s32.totalorder %s23, 0
    %p254 = por %p252, %p253
    %p255 = scmp.ne.s32.totalorder %s243, %s244
    %p256 = scmp.eq.s32.totalorder %s24, 1
    %p257 = por %p255, %p256
    %p259 = scmp.ne.s32.totalorder %s244, %s258
    %p260 = scmp.eq.s32.totalorder %s24, 0
    %p261 = por %p259, %p260
    %s262 = ssub.s32 %s25, %s37
    %s263 = ssub.s32 %s26, %s33
    %s264 = sor.u32 %s262, %s263
    %p265 = scmp.eq.s32.totalorder %s264, 0
    %s267 = sadd.s32 %s266, 1
    %s268 = scalar_select %p265, %s266, %s267
    %p271 = pneg %p265
    %p272 = scmp.eq.s32.totalorder %s18, 1
    %p273 = por %p271, %p272
    %p274 = scmp.ne.s32.totalorder %s266, %s269
    %p275 = scmp.eq.s32.totalorder %s18, 0
    %p276 = por %p274, %p275
    %p277 = scmp.ne.s32.totalorder %s266, %s269
    %p278 = scmp.eq.s32.totalorder %s23, 1
    %p279 = por %p277, %p278
    %p280 = scmp.ne.s32.totalorder %s269, %s270
    %p281 = scmp.eq.s32.totalorder %s23, 0
    %p282 = por %p280, %p281
    %p283 = scmp.ne.s32.totalorder %s269, %s270
    %p284 = scmp.eq.s32.totalorder %s24, 1
    %p285 = por %p283, %p284
    %p287 = scmp.ne.s32.totalorder %s270, %s286
    %p288 = scmp.eq.s32.totalorder %s24, 0
    %p289 = por %p287, %p288
    %s290 = ssub.s32 %s25, %s37
    %s291 = ssub.s32 %s26, %s33
    %s292 = sor.u32 %s290, %s291
    %p293 = scmp.eq.s32.totalorder %s292, 0
    %s295 = sadd.s32 %s294, 1
    %s296 = scalar_select %p293, %s294, %s295
    %p299 = pneg %p293
    %p300 = scmp.eq.s32.totalorder %s18, 1
    %p301 = por %p299, %p300
    %p302 = scmp.ne.s32.totalorder %s294, %s297
    %p303 = scmp.eq.s32.totalorder %s18, 0
    %p304 = por %p302, %p303
    %p305 = scmp.ne.s32.totalorder %s294, %s297
    %p306 = scmp.eq.s32.totalorder %s23, 1
    %p307 = por %p305, %p306
    %p308 = scmp.ne.s32.totalorder %s297, %s298
    %p309 = scmp.eq.s32.totalorder %s23, 0
    %p310 = por %p308, %p309
    %p311 = scmp.ne.s32.totalorder %s297, %s298
    %p312 = scmp.eq.s32.totalorder %s24, 1
    %p313 = por %p311, %p312
    %p315 = scmp.ne.s32.totalorder %s298, %s314
    %p316 = scmp.eq.s32.totalorder %s24, 0
    %p317 = por %p315, %p316
    %p318 = scmp.le.s32.totalorder 1, %s18
    %p319 = scmp.lt.s32.totalorder %s18, 3
    %p320 = pnand %p318, %p319
    %p321 = pneg %p320
    // Predicated region
    $region9: #{unet_block_forward.3} parent=5 // pred_check
      _
    $region10: #{unet_block_forward.3} parent=5 // pred_check_branch
      %323 = sbr.rel (%p320) target = $region12
    $region11: #{unet_block_forward.3} parent=5 // pred_region
      %s324 = ssub.s32 %s18, 1
      // Predicated region
      $region13: #{unet_block_forward.3} parent=11 // pred_check
        %p325 = pneg %p107
      $region14: #{unet_block_forward.3} parent=11 // pred_check_branch
        %327 = sbr.rel (%p325) target = $region16
      $region15: #{unet_block_forward.3} parent=11 // pred_region
        _
      $region16: #{unet_block_forward.3} parent=11 // pred_fallthru
        _
      // Predicated region
      $region17: #{unet_block_forward.3} parent=11 // pred_check
        %p328 = pneg %p128
      $region18: #{unet_block_forward.3} parent=11 // pred_check_branch
        %330 = sbr.rel (%p328) target = $region20
      $region19: #{unet_block_forward.3} parent=11 // pred_region
        _
      $region20: #{unet_block_forward.3} parent=11 // pred_fallthru
        _
      // Predicated region
      $region21: #{unet_block_forward.3} parent=11 // pred_check
        %p331 = pneg %p149
      $region22: #{unet_block_forward.3} parent=11 // pred_check_branch
        %333 = sbr.rel (%p331) target = $region24
      $region23: #{unet_block_forward.3} parent=11 // pred_region
        _
      $region24: #{unet_block_forward.3} parent=11 // pred_fallthru
        _
      // Predicated region
      $region25: #{unet_block_forward.3} parent=11 // pred_check
        %p334 = pneg %p170
      $region26: #{unet_block_forward.3} parent=11 // pred_check_branch
        %336 = sbr.rel (%p334) target = $region28
      $region27: #{unet_block_forward.3} parent=11 // pred_region
        _
      $region28: #{unet_block_forward.3} parent=11 // pred_fallthru
        _
      // Predicated region
      $region29: #{unet_block_forward.3} parent=11 // pred_check
        %p337 = pneg %p191
      $region30: #{unet_block_forward.3} parent=11 // pred_check_branch
        %339 = sbr.rel (%p337) target = $region32
      $region31: #{unet_block_forward.3} parent=11 // pred_region
        _
      $region32: #{unet_block_forward.3} parent=11 // pred_fallthru
        _
      // Predicated region
      $region33: #{unet_block_forward.3} parent=11 // pred_check
        %p340 = pneg %p212
      $region34: #{unet_block_forward.3} parent=11 // pred_check_branch
        %342 = sbr.rel (%p340) target = $region36
      $region35: #{unet_block_forward.3} parent=11 // pred_region
        _
      $region36: #{unet_block_forward.3} parent=11 // pred_fallthru
        _
      // Predicated region
      $region37: #{unet_block_forward.3} parent=11 // pred_check
        %p343 = pneg %p233
      $region38: #{unet_block_forward.3} parent=11 // pred_check_branch
        %345 = sbr.rel (%p343) target = $region40
      $region39: #{unet_block_forward.3} parent=11 // pred_region
        _
      $region40: #{unet_block_forward.3} parent=11 // pred_fallthru
        _
      // Predicated region
      $region41: #{unet_block_forward.3} parent=11 // pred_check
        %p346 = pneg %p254
      $region42: #{unet_block_forward.3} parent=11 // pred_check_branch
        %348 = sbr.rel (%p346) target = $region44
      $region43: #{unet_block_forward.3} parent=11 // pred_region
        _
      $region44: #{unet_block_forward.3} parent=11 // pred_fallthru
        _
    $region12: #{unet_block_forward.3} parent=5 // pred_fallthru
      _
    %p349 = scmp.lt.s32.totalorder %s18, 2
    // Predicated region
    $region45: #{unet_block_forward.3} parent=5 // pred_check
      %p350 = pneg %p349
    $region46: #{unet_block_forward.3} parent=5 // pred_check_branch
      %352 = sbr.rel (%p350) target = $region48
    $region47: #{unet_block_forward.3} parent=5 // pred_region
      // Predicated region
      $region49: #{unet_block_forward.3} parent=47 // pred_check
        %p353 = pneg %p52
      $region50: #{unet_block_forward.3} parent=47 // pred_check_branch
        %355 = sbr.rel (%p353) target = $region52
      $region51: #{unet_block_forward.3} parent=47 // pred_region
        %p356 = scmp.lt.s32.totalorder %s25, 1
        %s357 = scalar_select %p356, %s25, 1
        %p358 = scmp.lt.s32.totalorder %s26, 0
        %s359 = scalar_select %p358, %s26, 0
        %s360 = sadd.s32 %s359, %s357
        %s361 = smul.addr %s360, 8
        %s362 = scalar_lea.vmem %s0, %s361
      $region52: #{unet_block_forward.3} parent=47 // pred_fallthru
        _
      // Predicated region
      $region53: #{unet_block_forward.3} parent=47 // pred_check
        %p363 = pneg %p80
      $region54: #{unet_block_forward.3} parent=47 // pred_check_branch
        %365 = sbr.rel (%p363) target = $region56
      $region55: #{unet_block_forward.3} parent=47 // pred_region
        %s366 = smul.u32 2, %s26
        %p367 = scmp.lt.s32.totalorder %s25, 1
        %s368 = scalar_select %p367, %s25, 1
        %p369 = scmp.lt.s32.totalorder %s366, 1
        %s370 = scalar_select %p369, %s366, 1
        %s371 = smul.addr %s368, 2
        %s372 = sadd.s32 %s370, %s371
        %s373 = smul.addr %s372, 4
        %s374 = scalar_lea.vmem %s1, %s373
        %s375 = smul.u32 2, %s26
      $region56: #{unet_block_forward.3} parent=47 // pred_fallthru
        _
    $region48: #{unet_block_forward.3} parent=5 // pred_fallthru
      _
    %p376 = scmp.le.s32.totalorder 1, %s18
    %p377 = scmp.lt.s32.totalorder %s18, 3
    %p378 = pnand %p376, %p377
    %p379 = pneg %p378
    // Predicated region
    $region57: #{unet_block_forward.3} parent=5 // pred_check
      _
    $region58: #{unet_block_forward.3} parent=5 // pred_check_branch
      %381 = sbr.rel (%p378) target = $region60
    $region59: #{unet_block_forward.3} parent=5 // pred_region
      %s382 = ssub.s32 %s18, 1
      %p383 = scmp.lt.s32.totalorder %s27, 1
      %s384 = scalar_select %p383, %s27, 1
      %p385 = scmp.lt.s32.totalorder %s28, 0
      %s386 = scalar_select %p385, %s28, 0
      %s387 = sadd.s32 %s386, %s384
      %s388 = smul.addr %s387, 8
      %s389 = scalar_lea.vmem %s0, %s388
      %p390 = pneg %p58
      %p391 = pneg %p55
      %s392 = smul.u32 2, %s28
      %p393 = scmp.lt.s32.totalorder %s27, 1
      %s394 = scalar_select %p393, %s27, 1
      %p395 = scmp.lt.s32.totalorder %s392, 1
      %s396 = scalar_select %p395, %s392, 1
      %s397 = smul.addr %s394, 2
      %s398 = sadd.s32 %s396, %s397
      %s399 = smul.addr %s398, 4
      %s400 = scalar_lea.vmem %s1, %s399
      %p401 = pneg %p86
      %p402 = pneg %p83
      %p403 = pneg %p107
      %p404 = pneg %p104
      %p405 = pneg %p128
      %p406 = pneg %p125
      %p407 = pneg %p149
      %p408 = pneg %p146
      %p409 = pneg %p170
      %p410 = pneg %p167
      %p411 = pneg %p191
      %p412 = pneg %p188
      %p413 = pneg %p212
      %p414 = pneg %p209
      %p415 = pneg %p233
      %p416 = pneg %p230
      %p417 = pneg %p254
      %p418 = pneg %p251
      %p419 = pneg %p282
      %p420 = pneg %p279
      %p421 = scmp.lt.s32.totalorder %s27, 1
      %s422 = scalar_select %p421, %s27, 1
      %p423 = scmp.lt.s32.totalorder %s28, 0
      %s424 = scalar_select %p423, %s28, 0
      %s425 = smul.addr %s422, 2
      %s426 = sadd.s32 %s424, %s425
      %s427 = smul.addr %s426, 4
      %s428 = scalar_lea.vmem %s10, %s427
      %p429 = pneg %p310
      %p430 = pneg %p307
      %s431 = smul.u32 2, %s28
      %p432 = scmp.lt.s32.totalorder %s27, 1
      %s433 = scalar_select %p432, %s27, 1
      %p434 = scmp.lt.s32.totalorder %s431, 1
      %s435 = scalar_select %p434, %s431, 1
      %s436 = smul.addr %s433, 2
      %s437 = sadd.s32 %s435, %s436
      %s438 = smul.addr %s437, 2
      %s439 = scalar_lea.vmem %s11, %s438
      %p440 = scmp.lt.s32.totalorder %s27, 1
      %s441 = scalar_select %p440, %s27, 1
      %p442 = scmp.lt.s32.totalorder %s28, 0
      %s443 = scalar_select %p442, %s28, 0
      %s444 = sadd.s32 %s443, %s441
      %s445 = smul.addr %s444, 8
      %s446 = scalar_lea.vmem %s0, %s445
      %s447 = smul.u32 2, %s28
      %p448 = scmp.lt.s32.totalorder %s27, 1
      %s449 = scalar_select %p448, %s27, 1
      %p450 = scmp.lt.s32.totalorder %s447, 1
      %s451 = scalar_select %p450, %s447, 1
      %s452 = smul.addr %s449, 2
      %s453 = sadd.s32 %s451, %s452
      %s454 = smul.addr %s453, 4
      %s455 = scalar_lea.vmem %s1, %s454
      %s456 = smul.u32 2, %s28
      %p457 = scmp.lt.s32.totalorder %s27, 1
      %s458 = scalar_select %p457, %s27, 1
      %p459 = scmp.lt.s32.totalorder %s28, 0
      %s460 = scalar_select %p459, %s28, 0
      %s461 = smul.addr %s458, 2
      %s462 = sadd.s32 %s460, %s461
      %s463 = smul.addr %s462, 4
      %s464 = scalar_lea.vmem %s10, %s463
      %s465 = smul.u32 2, %s28
      %p466 = scmp.lt.s32.totalorder %s27, 1
      %s467 = scalar_select %p466, %s27, 1
      %p468 = scmp.lt.s32.totalorder %s465, 1
      %s469 = scalar_select %p468, %s465, 1
      %s470 = smul.addr %s467, 2
      %s471 = sadd.s32 %s469, %s470
      %s472 = smul.addr %s471, 2
      %s473 = scalar_lea.vmem %s11, %s472
      %s474 = smul.u32 2, %s28
      %v476 = vld [vmem:[%s2] sm:$0xf]
      %v477 = vld [vmem:[%s2 + $0x4] sm:$0xf]
      %v478 = vld [vmem:[%s446] sm:$0xff]
      %v479 = vpack.c.bf16 %v478, %v478
      %v480 = vld [vmem:[%s3] sm:$0xff]
      %v481 = vld [vmem:[%s3 + $0x8] sm:$0xff]
      %483 = vset.pattern.permute.xlu0 0
      %484 = vperm.xlu0 %483, %v480
      %v485 = vpop.permute.xlu0 %484
      %488 = vset.pattern.permute.xlu0 0
      %489 = vperm.xlu0 %488, %v481
      %v490 = vpop.permute.xlu0 %489
      %v494 = vunpack.c.l.b16 %v476
      %v495 = vunpack.c.l.b16 %v477
      %v496 = vpack.c.b16 %v495, %v494
      %vm497 = vcmask 64512
      %v499 = vsel %vm497, %v496, 0
      %vm501 = vcmask 1043456
      %v503 = vsel %vm501, %v479, 0
      %505 = vmatprep.subr.bf16.mxu0 0
      %506 = vmatpush1.bf16.msra.mxu0 0
      %507 = vmatprep.subr.bf16.mxu0 0
      %508 = vmatpush1.bf16.msra.mxu0 0
      %509 = vmatprep.subr.bf16.mxu0 0
      %510 = vmatpush1.bf16.msra.mxu0 0
      %511 = vmatprep.subr.bf16.mxu0 0
      %512 = vmatpush1.bf16.msra.mxu0 0
      %513 = vmatprep.subr.bf16.mxu0 0
      %514 = vmatpush1.bf16.msra.mxu0 0
      %515 = vmatprep.subr.bf16.mxu0 0
      %516 = vmatpush1.bf16.msra.mxu0 0
      %517 = vmatprep.subr.bf16.mxu0 0
      %518 = vmatpush1.bf16.msra.mxu0 0
      %519 = vmatprep.subr.bf16.mxu0 0
      %520 = vmatpush1.bf16.msra.mxu0 %v503
      %521 = vmatprep.subr.bf16.mxu0 0
      %522 = vmatpush2.bf16.msra.mxu0 0
      %523 = vmatprep.subr.bf16.mxu0 0
      %524 = vmatpush2.bf16.msra.mxu0 0
      %525 = vmatprep.subr.bf16.mxu0 0
      %526 = vmatpush2.bf16.msra.mxu0 0
      %527 = vmatprep.subr.bf16.mxu0 0
      %528 = vmatpush2.bf16.msra.mxu0 0
      %529 = vmatprep.subr.bf16.mxu0 0
      %530 = vmatpush2.bf16.msra.mxu0 0
      %531 = vmatprep.subr.bf16.mxu0 0
      %532 = vmatpush2.bf16.msra.mxu0 0
      %533 = vmatprep.subr.bf16.mxu0 0
      %534 = vmatpush2.bf16.msra.mxu0 0
      %535 = vmatprep.subr.bf16.mxu0 0
      %536 = vmatpush2.bf16.msra.mxu0 0
      %537 = vmatprep.mubr.bf16.mxu0 0
      %538 = vmatmul.mubr.bf16.gmra.mxu0 %v499
      %v539 = vpop.f32.mrf.mxu0
      %v540 = vadd.f32 %v485, %v539
      %v541 = vpop.f32.mrf.mxu0
      %v542 = vpop.f32.mrf.mxu0
      %v543 = vadd.f32 %v490, %v542
      %v544 = vpop.f32.mrf.mxu0
      %545 = vdwg.mxu0
      %v546 = vmax.f32 %v540, 0.0
      %v547 = vmax.f32 %v543, 0.0
      %v548 = vld [vmem:[%s6] sm:$0xff]
      %v549 = vld [vmem:[%s6 + $0x8] sm:$0xff]
      %551 = vset.pattern.permute.xlu0 0
      %552 = vperm.xlu0 %551, %v548
      %v553 = vpop.permute.xlu0 %552
      %556 = vset.pattern.permute.xlu0 0
      %557 = vperm.xlu0 %556, %v549
      %v558 = vpop.permute.xlu0 %557
      %v560 = vmul.f32 %v546, %v553
      %v561 = vmul.f32 %v547, %v558
      %v562 = vld [vmem:[%s7] sm:$0xff]
      %v563 = vld [vmem:[%s7 + $0x8] sm:$0xff]
      %565 = vset.pattern.permute.xlu0 0
      %566 = vperm.xlu0 %565, %v562
      %v567 = vpop.permute.xlu0 %566
      %570 = vset.pattern.permute.xlu0 0
      %571 = vperm.xlu0 %570, %v563
      %v572 = vpop.permute.xlu0 %571
      %v574 = vadd.f32 %v560, %v567
      %v575 = vadd.f32 %v561, %v572
      %v576 = vpack.c.bf16 %v575, %v574
      %v578 = vunpack.c.l.b16 %v576
      %v579 = vunpack.c.h.b16 %v576
      %v580 = vpack.c.b16 %v578, %v578
      %v581 = vpack.c.b16 %v579, %v579
      %vm584 = vcmask 519168
      %585 = vst.msk [vmem:[%s464] sm:$0xf] %vm584, %v580
      %586 = vst.msk [vmem:[%s464 + $0x4] sm:$0xf] %vm584, %v581
      %v587 = vld [vmem:[%s4] sm:$0x3]
      %v588 = vld [vmem:[%s455] sm:$0xff]
      %v590 = vcombine.high %v588, %v588
      %v592 = vpack.c.bf16 %v588, %v588
      %v593 = vpack.c.bf16 %v590, %v590
      %v594 = vld [vmem:[%s5] sm:$0xf]
      %596 = vset.pattern.permute.xlu0 0
      %597 = vperm.xlu0 %596, %v594
      %v598 = vpop.permute.xlu0 %597
      %vm600 = vcmask 31744
      %v602 = vsel %vm600, %v587, 0
      %vm604 = vcmask 1041408
      %v606 = vsel %vm604, %v592, 0
      %v609 = vsel %vm604, %v593, 0
      %611 = vmatprep.subr.bf16.mxu0 0
      %612 = vmatpush1.bf16.msra.mxu0 0
      %613 = vmatprep.subr.bf16.mxu0 0
      %614 = vmatpush1.bf16.msra.mxu0 0
      %615 = vmatprep.subr.bf16.mxu0 0
      %616 = vmatpush1.bf16.msra.mxu0 0
      %617 = vmatprep.subr.bf16.mxu0 0
      %618 = vmatpush1.bf16.msra.mxu0 0
      %619 = vmatprep.subr.bf16.mxu0 0
      %620 = vmatpush1.bf16.msra.mxu0 0
      %621 = vmatprep.subr.bf16.mxu0 0
      %622 = vmatpush1.bf16.msra.mxu0 0
      %623 = vmatprep.subr.bf16.mxu0 0
      %624 = vmatpush1.bf16.msra.mxu0 0
      %625 = vmatprep.subr.bf16.mxu0 %v609
      %626 = vmatpush1.bf16.msra.mxu0 %v606
      %627 = vmatprep.subr.bf16.mxu0 0
      %628 = vmatpush2.bf16.msra.mxu0 0
      %629 = vmatprep.subr.bf16.mxu0 0
      %630 = vmatpush2.bf16.msra.mxu0 0
      %631 = vmatprep.subr.bf16.mxu0 0
      %632 = vmatpush2.bf16.msra.mxu0 0
      %633 = vmatprep.subr.bf16.mxu0 0
      %634 = vmatpush2.bf16.msra.mxu0 0
      %635 = vmatprep.subr.bf16.mxu0 0
      %636 = vmatpush2.bf16.msra.mxu0 0
      %637 = vmatprep.subr.bf16.mxu0 0
      %638 = vmatpush2.bf16.msra.mxu0 0
      %639 = vmatprep.subr.bf16.mxu0 0
      %640 = vmatpush2.bf16.msra.mxu0 0
      %641 = vmatprep.subr.bf16.mxu0 0
      %642 = vmatpush2.bf16.msra.mxu0 0
      %643 = vmatprep.mubr.bf16.mxu0 0
      %644 = vmatmul.mubr.bf16.gmra.mxu0 %v602
      %v645 = vpop.f32.mrf.mxu0
      %v646 = vadd.f32 %v598, %v645
      %v647 = vpop.f32.mrf.mxu0
      %v648 = vadd.f32 %v598, %v647
      %v649 = vpop.f32.mrf.mxu0
      %v650 = vpop.f32.mrf.mxu0
      %651 = vdwg.mxu0
      %v652 = vmax.f32 %v646, 0.0
      %v653 = vmax.f32 %v648, 0.0
      %v654 = vld [vmem:[%s8] sm:$0xf]
      %656 = vset.pattern.permute.xlu0 0
      %657 = vperm.xlu0 %656, %v654
      %v658 = vpop.permute.xlu0 %657
      %v660 = vmul.f32 %v652, %v658
      %v661 = vmul.f32 %v653, %v658
      %v662 = vld [vmem:[%s9] sm:$0xf]
      %664 = vset.pattern.permute.xlu0 0
      %665 = vperm.xlu0 %664, %v662
      %v666 = vpop.permute.xlu0 %665
      %v668 = vadd.f32 %v660, %v666
      %v669 = vadd.f32 %v661, %v666
      %v670 = vpack.c.bf16 %v668, %v668
      %v671 = vpack.c.bf16 %v669, %v669
      %v674 = vcombine.low %v670, %v671
      %v676 = vunpack.c.l.s4 1983009808
      %v677 = vunpack.c.0.s8 %v676
      %v678 = vlaneseq
      %v679 = vshrl.u32 %v678, 7
      %v680 = vsub.s32 %v677, %v679
      %v681 = vrot.slane %v674, %v680
      %683 = vst [vmem:[%s473] sm:$0xf] %v681
      %p684 = scmp.lt.s32.totalorder %s27, 1
      %s685 = scalar_select %p684, %s27, 1
      %p686 = scmp.lt.s32.totalorder %s28, 0
      %s687 = scalar_select %p686, %s28, 0
      %s688 = smul.addr %s685, 2
      %s689 = sadd.s32 %s687, %s688
      %s690 = smul.addr %s689, 4
      %s691 = scalar_lea.vmem %s10, %s690
      %s692 = smul.u32 2, %s28
      %p693 = scmp.lt.s32.totalorder %s27, 1
      %s694 = scalar_select %p693, %s27, 1
      %p695 = scmp.lt.s32.totalorder %s692, 1
      %s696 = scalar_select %p695, %s692, 1
      %s697 = smul.addr %s694, 2
      %s698 = sadd.s32 %s696, %s697
      %s699 = smul.addr %s698, 2
      %s700 = scalar_lea.vmem %s11, %s699
      // Predicated region
      $region61: #{unet_block_forward.3} parent=59 // pred_check
        %p701 = pneg %p279
      $region62: #{unet_block_forward.3} parent=59 // pred_check_branch
        %703 = sbr.rel (%p701) target = $region64
      $region63: #{unet_block_forward.3} parent=59 // pred_region
        _
      $region64: #{unet_block_forward.3} parent=59 // pred_fallthru
        _
      // Predicated region
      $region65: #{unet_block_forward.3} parent=59 // pred_check
        %p704 = pneg %p307
      $region66: #{unet_block_forward.3} parent=59 // pred_check_branch
        %706 = sbr.rel (%p704) target = $region68
      $region67: #{unet_block_forward.3} parent=59 // pred_region
        %s707 = smul.u32 2, %s28
      $region68: #{unet_block_forward.3} parent=59 // pred_fallthru
        _
    $region60: #{unet_block_forward.3} parent=5 // pred_fallthru
      _
    %p708 = scmp.le.s32.totalorder 2, %s18
    // Predicated region
    $region69: #{unet_block_forward.3} parent=5 // pred_check
      %p709 = pneg %p708
    $region70: #{unet_block_forward.3} parent=5 // pred_check_branch
      %711 = sbr.rel (%p709) target = $region72
    $region71: #{unet_block_forward.3} parent=5 // pred_region
      %s712 = ssub.s32 %s18, 2
      // Predicated region
      $region73: #{unet_block_forward.3} parent=71 // pred_check
        %p713 = pneg %p285
      $region74: #{unet_block_forward.3} parent=71 // pred_check_branch
        %715 = sbr.rel (%p713) target = $region76
      $region75: #{unet_block_forward.3} parent=71 // pred_region
        %p716 = scmp.lt.s32.totalorder %s29, 1
        %s717 = scalar_select %p716, %s29, 1
        %p718 = scmp.lt.s32.totalorder %s30, 0
        %s719 = scalar_select %p718, %s30, 0
        %s720 = smul.addr %s717, 2
        %s721 = sadd.s32 %s719, %s720
        %s722 = smul.addr %s721, 4
        %s723 = scalar_lea.vmem %s10, %s722
      $region76: #{unet_block_forward.3} parent=71 // pred_fallthru
        _
      // Predicated region
      $region77: #{unet_block_forward.3} parent=71 // pred_check
        %p724 = pneg %p313
      $region78: #{unet_block_forward.3} parent=71 // pred_check_branch
        %726 = sbr.rel (%p724) target = $region80
      $region79: #{unet_block_forward.3} parent=71 // pred_region
        %s727 = smul.u32 2, %s30
        %p728 = scmp.lt.s32.totalorder %s29, 1
        %s729 = scalar_select %p728, %s29, 1
        %p730 = scmp.lt.s32.totalorder %s727, 1
        %s731 = scalar_select %p730, %s727, 1
        %s732 = smul.addr %s729, 2
        %s733 = sadd.s32 %s731, %s732
        %s734 = smul.addr %s733, 2
        %s735 = scalar_lea.vmem %s11, %s734
      $region80: #{unet_block_forward.3} parent=71 // pred_fallthru
        _
    $region72: #{unet_block_forward.3} parent=5 // pred_fallthru
      _
  $region6: #{unet_block_forward.3} parent=0 // loop_footer
    %s22 = sadd.s32 1, %s18
  $region7: #{unet_block_forward.3} parent=0 // loop_footer_branch
    %17 = sbr.rel target = $region3
  $region8: #{unet_block_forward.3} parent=0 // loop_exit
    _

// kernel: unet_block_forward.2
$region0: #{unet_block_forward.2}
  #allocation0 [shape = 'u32[]', space=smem, size = 0x4, offset = 0x4, fixed_abs, tag = 'smem constant byte address 0x4 - core index']
  #allocation1 [shape = 'u32[144,128]{1,0:T(1,128)}', space=vmem, size = 0x12000, scoped, tag = 'internal scratch']
  %s0 = inlined_call_operand.vmem [shape: f32[2,8,64], index: 0, kind: input, shape index: {}]
  %s1 = inlined_call_operand.vmem [shape: f32[2,4,256], index: 1, kind: input, shape index: {}]
  %s2 = inlined_call_operand.vmem [shape: bf16[16,8], index: 2, kind: input, shape index: {}]
  %s3 = inlined_call_operand.vmem [shape: f32[16,1], index: 3, kind: input, shape index: {}]
  %s4 = inlined_call_operand.vmem [shape: bf16[4,4], index: 4, kind: input, shape index: {}]
  %s5 = inlined_call_operand.vmem [shape: f32[4,1], index: 5, kind: input, shape index: {}]
  %s6 = inlined_call_operand.vmem [shape: f32[2,1,16,1], index: 6, kind: output, shape index: {0}]
  %s7 = inlined_call_operand.vmem [shape: f32[2,1,16,1], index: 7, kind: output, shape index: {1}]
  %s8 = inlined_call_operand.vmem [shape: f32[2,1,4,1], index: 8, kind: output, shape index: {2}]
  %s9 = inlined_call_operand.vmem [shape: f32[2,1,4,1], index: 9, kind: output, shape index: {3}]
  %10 = xla_tuple %s6, %s7, %s8, %s9
  %s11 = sld [smem:[#allocation0]]
  $region81: #{unet_block_forward.2} parent=0
    _
  %s13 = ssub.s32 1, %s11
  %s14 = scalar_select 0, %s13, %s11
  loop: start=0, step=1, limit=4
  $region2: #{unet_block_forward.2} parent=0 // loop_pre_header
    _
  $region3: #{unet_block_forward.2} parent=0 // loop_header
    %s16 = sphi 0, %s20
    %p17 = scmp.ge.s32.totalorder %s16, 4
    %s23 = sphi 0, %s35
    %s24 = sphi 0, %s31
    %s25 = sphi 0, %s23
    %s26 = sphi 0, %s24
    %s27 = sphi 0, %s25
    %s28 = sphi 0, %s26
    %s40 = sphi 0, %s42
    %s43 = sphi 0, %s40
    %s44 = sphi 0, %s43
    %s60 = sphi 0, %s44
    %s68 = sphi 0, %s70
    %s71 = sphi 0, %s68
    %s72 = sphi 0, %s71
    %s88 = sphi 0, %s72
    %s92 = sphi 0, %s92
    %s94 = sphi 0, %s92
    %s95 = sphi 0, %s94
    %s109 = sphi 0, %s95
    %s113 = sphi 0, %s113
    %s115 = sphi 0, %s113
    %s116 = sphi 0, %s115
    %s130 = sphi 0, %s116
    %s134 = sphi 0, %s134
    %s136 = sphi 0, %s134
    %s137 = sphi 0, %s136
    %s151 = sphi 0, %s137
    %s155 = sphi 0, %s155
    %s157 = sphi 0, %s155
    %s158 = sphi 0, %s157
    %s172 = sphi 0, %s158
    %s180 = sphi 0, %s182
    %s183 = sphi 0, %s180
    %s184 = sphi 0, %s183
    %s200 = sphi 0, %s184
    %s208 = sphi 0, %s210
    %s211 = sphi 0, %s208
    %s212 = sphi 0, %s211
    %s228 = sphi 0, %s212
    %s236 = sphi 0, %s238
    %s239 = sphi 0, %s236
    %s240 = sphi 0, %s239
    %s256 = sphi 0, %s240
    %s264 = sphi 0, %s266
    %s267 = sphi 0, %s264
    %s268 = sphi 0, %s267
    %s284 = sphi 0, %s268
  $region4: #{unet_block_forward.2} parent=0 // loop_header_branch
    %19 = sbr.rel (%p17) target = $region8
  $region5: #{unet_block_forward.2} parent=0 // loop_body
    %s21 = ssub.s32 %s16, 1
    %s22 = ssub.s32 %s16, 2
    %s29 = sadd.s32 1, %s24
    %p30 = scmp.ge.s32.totalorder %s29, 1
    %s31 = scalar_select %p30, 0, %s29
    %s32 = sadd.s32 1, %s23
    %s33 = scalar_select %p30, %s32, %s23
    %p34 = scmp.ge.s32.totalorder %s33, 2
    %s35 = scalar_select %p34, 0, %s33
    %s36 = ssub.s32 %s23, %s35
    %s37 = ssub.s32 %s24, %s31
    %s38 = sor.u32 %s36, %s37
    %p39 = scmp.eq.s32.totalorder %s38, 0
    %s41 = sadd.s32 %s40, 1
    %s42 = scalar_select %p39, %s40, %s41
    %p45 = pneg %p39
    %p46 = scmp.eq.s32.totalorder %s16, 1
    %p47 = por %p45, %p46
    %p48 = scmp.ne.s32.totalorder %s40, %s43
    %p49 = scmp.eq.s32.totalorder %s16, 0
    %p50 = por %p48, %p49
    %p51 = scmp.ne.s32.totalorder %s40, %s43
    %p52 = scmp.eq.s32.totalorder %s21, 1
    %p53 = por %p51, %p52
    %p54 = scmp.ne.s32.totalorder %s43, %s44
    %p55 = scmp.eq.s32.totalorder %s21, 0
    %p56 = por %p54, %p55
    %p57 = scmp.ne.s32.totalorder %s43, %s44
    %p58 = scmp.eq.s32.totalorder %s22, 1
    %p59 = por %p57, %p58
    %p61 = scmp.ne.s32.totalorder %s44, %s60
    %p62 = scmp.eq.s32.totalorder %s22, 0
    %p63 = por %p61, %p62
    %s64 = ssub.s32 %s23, %s35
    %s65 = ssub.s32 %s24, %s31
    %s66 = sor.u32 %s64, %s65
    %p67 = scmp.eq.s32.totalorder %s66, 0
    %s69 = sadd.s32 %s68, 1
    %s70 = scalar_select %p67, %s68, %s69
    %p73 = pneg %p67
    %p74 = scmp.eq.s32.totalorder %s16, 1
    %p75 = por %p73, %p74
    %p76 = scmp.ne.s32.totalorder %s68, %s71
    %p77 = scmp.eq.s32.totalorder %s16, 0
    %p78 = por %p76, %p77
    %p79 = scmp.ne.s32.totalorder %s68, %s71
    %p80 = scmp.eq.s32.totalorder %s21, 1
    %p81 = por %p79, %p80
    %p82 = scmp.ne.s32.totalorder %s71, %s72
    %p83 = scmp.eq.s32.totalorder %s21, 0
    %p84 = por %p82, %p83
    %p85 = scmp.ne.s32.totalorder %s71, %s72
    %p86 = scmp.eq.s32.totalorder %s22, 1
    %p87 = por %p85, %p86
    %p89 = scmp.ne.s32.totalorder %s72, %s88
    %p90 = scmp.eq.s32.totalorder %s22, 0
    %p91 = por %p89, %p90
    %s93 = sadd.s32 %s92, 1
    %p96 = scmp.eq.s32.totalorder %s16, 1
    %p97 = scmp.ne.s32.totalorder %s92, %s94
    %p98 = scmp.eq.s32.totalorder %s16, 0
    %p99 = por %p97, %p98
    %p100 = scmp.ne.s32.totalorder %s92, %s94
    %p101 = scmp.eq.s32.totalorder %s21, 1
    %p102 = por %p100, %p101
    %p103 = scmp.ne.s32.totalorder %s94, %s95
    %p104 = scmp.eq.s32.totalorder %s21, 0
    %p105 = por %p103, %p104
    %p106 = scmp.ne.s32.totalorder %s94, %s95
    %p107 = scmp.eq.s32.totalorder %s22, 1
    %p108 = por %p106, %p107
    %p110 = scmp.ne.s32.totalorder %s95, %s109
    %p111 = scmp.eq.s32.totalorder %s22, 0
    %p112 = por %p110, %p111
    %s114 = sadd.s32 %s113, 1
    %p117 = scmp.eq.s32.totalorder %s16, 1
    %p118 = scmp.ne.s32.totalorder %s113, %s115
    %p119 = scmp.eq.s32.totalorder %s16, 0
    %p120 = por %p118, %p119
    %p121 = scmp.ne.s32.totalorder %s113, %s115
    %p122 = scmp.eq.s32.totalorder %s21, 1
    %p123 = por %p121, %p122
    %p124 = scmp.ne.s32.totalorder %s115, %s116
    %p125 = scmp.eq.s32.totalorder %s21, 0
    %p126 = por %p124, %p125
    %p127 = scmp.ne.s32.totalorder %s115, %s116
    %p128 = scmp.eq.s32.totalorder %s22, 1
    %p129 = por %p127, %p128
    %p131 = scmp.ne.s32.totalorder %s116, %s130
    %p132 = scmp.eq.s32.totalorder %s22, 0
    %p133 = por %p131, %p132
    %s135 = sadd.s32 %s134, 1
    %p138 = scmp.eq.s32.totalorder %s16, 1
    %p139 = scmp.ne.s32.totalorder %s134, %s136
    %p140 = scmp.eq.s32.totalorder %s16, 0
    %p141 = por %p139, %p140
    %p142 = scmp.ne.s32.totalorder %s134, %s136
    %p143 = scmp.eq.s32.totalorder %s21, 1
    %p144 = por %p142, %p143
    %p145 = scmp.ne.s32.totalorder %s136, %s137
    %p146 = scmp.eq.s32.totalorder %s21, 0
    %p147 = por %p145, %p146
    %p148 = scmp.ne.s32.totalorder %s136, %s137
    %p149 = scmp.eq.s32.totalorder %s22, 1
    %p150 = por %p148, %p149
    %p152 = scmp.ne.s32.totalorder %s137, %s151
    %p153 = scmp.eq.s32.totalorder %s22, 0
    %p154 = por %p152, %p153
    %s156 = sadd.s32 %s155, 1
    %p159 = scmp.eq.s32.totalorder %s16, 1
    %p160 = scmp.ne.s32.totalorder %s155, %s157
    %p161 = scmp.eq.s32.totalorder %s16, 0
    %p162 = por %p160, %p161
    %p163 = scmp.ne.s32.totalorder %s155, %s157
    %p164 = scmp.eq.s32.totalorder %s21, 1
    %p165 = por %p163, %p164
    %p166 = scmp.ne.s32.totalorder %s157, %s158
    %p167 = scmp.eq.s32.totalorder %s21, 0
    %p168 = por %p166, %p167
    %p169 = scmp.ne.s32.totalorder %s157, %s158
    %p170 = scmp.eq.s32.totalorder %s22, 1
    %p171 = por %p169, %p170
    %p173 = scmp.ne.s32.totalorder %s158, %s172
    %p174 = scmp.eq.s32.totalorder %s22, 0
    %p175 = por %p173, %p174
    %s176 = ssub.s32 %s23, %s35
    %s177 = ssub.s32 %s24, %s31
    %s178 = sor.u32 %s176, %s177
    %p179 = scmp.eq.s32.totalorder %s178, 0
    %s181 = sadd.s32 %s180, 1
    %s182 = scalar_select %p179, %s180, %s181
    %p185 = pneg %p179
    %p186 = scmp.eq.s32.totalorder %s16, 1
    %p187 = por %p185, %p186
    %p188 = scmp.ne.s32.totalorder %s180, %s183
    %p189 = scmp.eq.s32.totalorder %s16, 0
    %p190 = por %p188, %p189
    %p191 = scmp.ne.s32.totalorder %s180, %s183
    %p192 = scmp.eq.s32.totalorder %s21, 1
    %p193 = por %p191, %p192
    %p194 = scmp.ne.s32.totalorder %s183, %s184
    %p195 = scmp.eq.s32.totalorder %s21, 0
    %p196 = por %p194, %p195
    %p197 = scmp.ne.s32.totalorder %s183, %s184
    %p198 = scmp.eq.s32.totalorder %s22, 1
    %p199 = por %p197, %p198
    %p201 = scmp.ne.s32.totalorder %s184, %s200
    %p202 = scmp.eq.s32.totalorder %s22, 0
    %p203 = por %p201, %p202
    %s204 = ssub.s32 %s23, %s35
    %s205 = ssub.s32 %s24, %s31
    %s206 = sor.u32 %s204, %s205
    %p207 = scmp.eq.s32.totalorder %s206, 0
    %s209 = sadd.s32 %s208, 1
    %s210 = scalar_select %p207, %s208, %s209
    %p213 = pneg %p207
    %p214 = scmp.eq.s32.totalorder %s16, 1
    %p215 = por %p213, %p214
    %p216 = scmp.ne.s32.totalorder %s208, %s211
    %p217 = scmp.eq.s32.totalorder %s16, 0
    %p218 = por %p216, %p217
    %p219 = scmp.ne.s32.totalorder %s208, %s211
    %p220 = scmp.eq.s32.totalorder %s21, 1
    %p221 = por %p219, %p220
    %p222 = scmp.ne.s32.totalorder %s211, %s212
    %p223 = scmp.eq.s32.totalorder %s21, 0
    %p224 = por %p222, %p223
    %p225 = scmp.ne.s32.totalorder %s211, %s212
    %p226 = scmp.eq.s32.totalorder %s22, 1
    %p227 = por %p225, %p226
    %p229 = scmp.ne.s32.totalorder %s212, %s228
    %p230 = scmp.eq.s32.totalorder %s22, 0
    %p231 = por %p229, %p230
    %s232 = ssub.s32 %s23, %s35
    %s233 = ssub.s32 %s24, %s31
    %s234 = sor.u32 %s232, %s233
    %p235 = scmp.eq.s32.totalorder %s234, 0
    %s237 = sadd.s32 %s236, 1
    %s238 = scalar_select %p235, %s236, %s237
    %p241 = pneg %p235
    %p242 = scmp.eq.s32.totalorder %s16, 1
    %p243 = por %p241, %p242
    %p244 = scmp.ne.s32.totalorder %s236, %s239
    %p245 = scmp.eq.s32.totalorder %s16, 0
    %p246 = por %p244, %p245
    %p247 = scmp.ne.s32.totalorder %s236, %s239
    %p248 = scmp.eq.s32.totalorder %s21, 1
    %p249 = por %p247, %p248
    %p250 = scmp.ne.s32.totalorder %s239, %s240
    %p251 = scmp.eq.s32.totalorder %s21, 0
    %p252 = por %p250, %p251
    %p253 = scmp.ne.s32.totalorder %s239, %s240
    %p254 = scmp.eq.s32.totalorder %s22, 1
    %p255 = por %p253, %p254
    %p257 = scmp.ne.s32.totalorder %s240, %s256
    %p258 = scmp.eq.s32.totalorder %s22, 0
    %p259 = por %p257, %p258
    %s260 = ssub.s32 %s23, %s35
    %s261 = ssub.s32 %s24, %s31
    %s262 = sor.u32 %s260, %s261
    %p263 = scmp.eq.s32.totalorder %s262, 0
    %s265 = sadd.s32 %s264, 1
    %s266 = scalar_select %p263, %s264, %s265
    %p269 = pneg %p263
    %p270 = scmp.eq.s32.totalorder %s16, 1
    %p271 = por %p269, %p270
    %p272 = scmp.ne.s32.totalorder %s264, %s267
    %p273 = scmp.eq.s32.totalorder %s16, 0
    %p274 = por %p272, %p273
    %p275 = scmp.ne.s32.totalorder %s264, %s267
    %p276 = scmp.eq.s32.totalorder %s21, 1
    %p277 = por %p275, %p276
    %p278 = scmp.ne.s32.totalorder %s267, %s268
    %p279 = scmp.eq.s32.totalorder %s21, 0
    %p280 = por %p278, %p279
    %p281 = scmp.ne.s32.totalorder %s267, %s268
    %p282 = scmp.eq.s32.totalorder %s22, 1
    %p283 = por %p281, %p282
    %p285 = scmp.ne.s32.totalorder %s268, %s284
    %p286 = scmp.eq.s32.totalorder %s22, 0
    %p287 = por %p285, %p286
    %p288 = scmp.le.s32.totalorder 1, %s16
    %p289 = scmp.lt.s32.totalorder %s16, 3
    %p290 = pnand %p288, %p289
    %p291 = pneg %p290
    // Predicated region
    $region9: #{unet_block_forward.2} parent=5 // pred_check
      _
    $region10: #{unet_block_forward.2} parent=5 // pred_check_branch
      %293 = sbr.rel (%p290) target = $region12
    $region11: #{unet_block_forward.2} parent=5 // pred_region
      %s294 = ssub.s32 %s16, 1
      // Predicated region
      $region13: #{unet_block_forward.2} parent=11 // pred_check
        %p295 = pneg %p105
      $region14: #{unet_block_forward.2} parent=11 // pred_check_branch
        %297 = sbr.rel (%p295) target = $region16
      $region15: #{unet_block_forward.2} parent=11 // pred_region
        _
      $region16: #{unet_block_forward.2} parent=11 // pred_fallthru
        _
      // Predicated region
      $region17: #{unet_block_forward.2} parent=11 // pred_check
        %p298 = pneg %p126
      $region18: #{unet_block_forward.2} parent=11 // pred_check_branch
        %300 = sbr.rel (%p298) target = $region20
      $region19: #{unet_block_forward.2} parent=11 // pred_region
        _
      $region20: #{unet_block_forward.2} parent=11 // pred_fallthru
        _
      // Predicated region
      $region21: #{unet_block_forward.2} parent=11 // pred_check
        %p301 = pneg %p147
      $region22: #{unet_block_forward.2} parent=11 // pred_check_branch
        %303 = sbr.rel (%p301) target = $region24
      $region23: #{unet_block_forward.2} parent=11 // pred_region
        _
      $region24: #{unet_block_forward.2} parent=11 // pred_fallthru
        _
      // Predicated region
      $region25: #{unet_block_forward.2} parent=11 // pred_check
        %p304 = pneg %p168
      $region26: #{unet_block_forward.2} parent=11 // pred_check_branch
        %306 = sbr.rel (%p304) target = $region28
      $region27: #{unet_block_forward.2} parent=11 // pred_region
        _
      $region28: #{unet_block_forward.2} parent=11 // pred_fallthru
        _
    $region12: #{unet_block_forward.2} parent=5 // pred_fallthru
      _
    %p307 = scmp.lt.s32.totalorder %s16, 2
    // Predicated region
    $region29: #{unet_block_forward.2} parent=5 // pred_check
      %p308 = pneg %p307
    $region30: #{unet_block_forward.2} parent=5 // pred_check_branch
      %310 = sbr.rel (%p308) target = $region32
    $region31: #{unet_block_forward.2} parent=5 // pred_region
      // Predicated region
      $region33: #{unet_block_forward.2} parent=31 // pred_check
        %p311 = pneg %p50
      $region34: #{unet_block_forward.2} parent=31 // pred_check_branch
        %313 = sbr.rel (%p311) target = $region36
      $region35: #{unet_block_forward.2} parent=31 // pred_region
        %p314 = scmp.lt.s32.totalorder %s23, 1
        %s315 = scalar_select %p314, %s23, 1
        %p316 = scmp.lt.s32.totalorder %s24, 0
        %s317 = scalar_select %p316, %s24, 0
        %s318 = sadd.s32 %s317, %s315
        %s319 = smul.addr %s318, 8
        %s320 = scalar_lea.vmem %s0, %s319
      $region36: #{unet_block_forward.2} parent=31 // pred_fallthru
        _
      // Predicated region
      $region37: #{unet_block_forward.2} parent=31 // pred_check
        %p321 = pneg %p78
      $region38: #{unet_block_forward.2} parent=31 // pred_check_branch
        %323 = sbr.rel (%p321) target = $region40
      $region39: #{unet_block_forward.2} parent=31 // pred_region
        %s324 = smul.u32 2, %s24
        %p325 = scmp.lt.s32.totalorder %s23, 1
        %s326 = scalar_select %p325, %s23, 1
        %p327 = scmp.lt.s32.totalorder %s324, 1
        %s328 = scalar_select %p327, %s324, 1
        %s329 = smul.addr %s326, 2
        %s330 = sadd.s32 %s328, %s329
        %s331 = smul.addr %s330, 4
        %s332 = scalar_lea.vmem %s1, %s331
        %s333 = smul.u32 2, %s24
      $region40: #{unet_block_forward.2} parent=31 // pred_fallthru
        _
    $region32: #{unet_block_forward.2} parent=5 // pred_fallthru
      _
    %p334 = scmp.le.s32.totalorder 1, %s16
    %p335 = scmp.lt.s32.totalorder %s16, 3
    %p336 = pnand %p334, %p335
    %p337 = pneg %p336
    // Predicated region
    $region41: #{unet_block_forward.2} parent=5 // pred_check
      _
    $region42: #{unet_block_forward.2} parent=5 // pred_check_branch
      %339 = sbr.rel (%p336) target = $region44
    $region43: #{unet_block_forward.2} parent=5 // pred_region
      %s340 = ssub.s32 %s16, 1
      %p341 = scmp.lt.s32.totalorder %s25, 1
      %s342 = scalar_select %p341, %s25, 1
      %p343 = scmp.lt.s32.totalorder %s26, 0
      %s344 = scalar_select %p343, %s26, 0
      %s345 = sadd.s32 %s344, %s342
      %s346 = smul.addr %s345, 8
      %s347 = scalar_lea.vmem %s0, %s346
      %p348 = pneg %p56
      %p349 = pneg %p53
      %s350 = smul.u32 2, %s26
      %p351 = scmp.lt.s32.totalorder %s25, 1
      %s352 = scalar_select %p351, %s25, 1
      %p353 = scmp.lt.s32.totalorder %s350, 1
      %s354 = scalar_select %p353, %s350, 1
      %s355 = smul.addr %s352, 2
      %s356 = sadd.s32 %s354, %s355
      %s357 = smul.addr %s356, 4
      %s358 = scalar_lea.vmem %s1, %s357
      %p359 = pneg %p84
      %p360 = pneg %p81
      %p361 = pneg %p105
      %p362 = pneg %p102
      %p363 = pneg %p126
      %p364 = pneg %p123
      %p365 = pneg %p147
      %p366 = pneg %p144
      %p367 = pneg %p168
      %p368 = pneg %p165
      %p369 = pneg %p196
      %p370 = pneg %p193
      %p371 = scmp.lt.s32.totalorder %s25, 1
      %s372 = scalar_select %p371, %s25, 1
      %p373 = scmp.lt.s32.totalorder %s26, 0
      %s374 = scalar_select %p373, %s26, 0
      %s375 = smul.addr %s374, 2
      %s376 = smul.addr %s372, 2
      %s377 = sadd.s32 %s375, %s376
      %s378 = smul.addr %s377, 8
      %s379 = scalar_lea.vmem %s6, %s378
      %p380 = pneg %p224
      %p381 = pneg %p221
      %p382 = scmp.lt.s32.totalorder %s25, 1
      %s383 = scalar_select %p382, %s25, 1
      %p384 = scmp.lt.s32.totalorder %s26, 0
      %s385 = scalar_select %p384, %s26, 0
      %s386 = smul.addr %s385, 2
      %s387 = smul.addr %s383, 2
      %s388 = sadd.s32 %s386, %s387
      %s389 = smul.addr %s388, 8
      %s390 = scalar_lea.vmem %s7, %s389
      %p391 = pneg %p252
      %p392 = pneg %p249
      %p393 = scmp.lt.s32.totalorder %s25, 1
      %s394 = scalar_select %p393, %s25, 1
      %p395 = scmp.lt.s32.totalorder %s26, 0
      %s396 = scalar_select %p395, %s26, 0
      %s397 = sadd.s32 %s396, %s394
      %s398 = smul.addr %s397, 4
      %s399 = scalar_lea.vmem %s8, %s398
      %p400 = pneg %p280
      %p401 = pneg %p277
      %p402 = scmp.lt.s32.totalorder %s25, 1
      %s403 = scalar_select %p402, %s25, 1
      %p404 = scmp.lt.s32.totalorder %s26, 0
      %s405 = scalar_select %p404, %s26, 0
      %s406 = sadd.s32 %s405, %s403
      %s407 = smul.addr %s406, 4
      %s408 = scalar_lea.vmem %s9, %s407
      %p409 = scmp.lt.s32.totalorder %s25, 1
      %s410 = scalar_select %p409, %s25, 1
      %p411 = scmp.lt.s32.totalorder %s26, 0
      %s412 = scalar_select %p411, %s26, 0
      %s413 = sadd.s32 %s412, %s410
      %s414 = smul.addr %s413, 8
      %s415 = scalar_lea.vmem %s0, %s414
      %s416 = smul.u32 2, %s26
      %p417 = scmp.lt.s32.totalorder %s25, 1
      %s418 = scalar_select %p417, %s25, 1
      %p419 = scmp.lt.s32.totalorder %s416, 1
      %s420 = scalar_select %p419, %s416, 1
      %s421 = smul.addr %s418, 2
      %s422 = sadd.s32 %s420, %s421
      %s423 = smul.addr %s422, 4
      %s424 = scalar_lea.vmem %s1, %s423
      %s425 = smul.u32 2, %s26
      %p426 = scmp.lt.s32.totalorder %s25, 1
      %s427 = scalar_select %p426, %s25, 1
      %p428 = scmp.lt.s32.totalorder %s26, 0
      %s429 = scalar_select %p428, %s26, 0
      %s430 = smul.addr %s429, 2
      %s431 = smul.addr %s427, 2
      %s432 = sadd.s32 %s430, %s431
      %s433 = smul.addr %s432, 8
      %s434 = scalar_lea.vmem %s6, %s433
      %p435 = scmp.lt.s32.totalorder %s25, 1
      %s436 = scalar_select %p435, %s25, 1
      %p437 = scmp.lt.s32.totalorder %s26, 0
      %s438 = scalar_select %p437, %s26, 0
      %s439 = smul.addr %s438, 2
      %s440 = smul.addr %s436, 2
      %s441 = sadd.s32 %s439, %s440
      %s442 = smul.addr %s441, 8
      %s443 = scalar_lea.vmem %s7, %s442
      %p444 = scmp.lt.s32.totalorder %s25, 1
      %s445 = scalar_select %p444, %s25, 1
      %p446 = scmp.lt.s32.totalorder %s26, 0
      %s447 = scalar_select %p446, %s26, 0
      %s448 = sadd.s32 %s447, %s445
      %s449 = smul.addr %s448, 4
      %s450 = scalar_lea.vmem %s8, %s449
      %p451 = scmp.lt.s32.totalorder %s25, 1
      %s452 = scalar_select %p451, %s25, 1
      %p453 = scmp.lt.s32.totalorder %s26, 0
      %s454 = scalar_select %p453, %s26, 0
      %s455 = sadd.s32 %s454, %s452
      %s456 = smul.addr %s455, 4
      %s457 = scalar_lea.vmem %s9, %s456
      %v459 = vld [vmem:[%s2] sm:$0xf]
      %v460 = vld [vmem:[%s2 + $0x4] sm:$0xf]
      %v461 = vld [vmem:[%s415] sm:$0xff]
      %v462 = vpack.c.bf16 %v461, %v461
      %v463 = vld [vmem:[%s3] sm:$0xff]
      %v464 = vld [vmem:[%s3 + $0x8] sm:$0xff]
      %466 = vset.pattern.permute.xlu0 0
      %467 = vperm.xlu0 %466, %v463
      %v468 = vpop.permute.xlu0 %467
      %471 = vset.pattern.permute.xlu0 0
      %472 = vperm.xlu0 %471, %v464
      %v473 = vpop.permute.xlu0 %472
      %v477 = vunpack.c.l.b16 %v459
      %v478 = vunpack.c.l.b16 %v460
      %v479 = vpack.c.b16 %v478, %v477
      %vm480 = vcmask 64512
      %v482 = vsel %vm480, %v479, 0
      %vm484 = vcmask 1043456
      %v486 = vsel %vm484, %v462, 0
      %488 = vmatprep.subr.bf16.mxu0 0
      %489 = vmatpush1.bf16.msra.mxu0 0
      %490 = vmatprep.subr.bf16.mxu0 0
      %491 = vmatpush1.bf16.msra.mxu0 0
      %492 = vmatprep.subr.bf16.mxu0 0
      %493 = vmatpush1.bf16.msra.mxu0 0
      %494 = vmatprep.subr.bf16.mxu0 0
      %495 = vmatpush1.bf16.msra.mxu0 0
      %496 = vmatprep.subr.bf16.mxu0 0
      %497 = vmatpush1.bf16.msra.mxu0 0
      %498 = vmatprep.subr.bf16.mxu0 0
      %499 = vmatpush1.bf16.msra.mxu0 0
      %500 = vmatprep.subr.bf16.mxu0 0
      %501 = vmatpush1.bf16.msra.mxu0 0
      %502 = vmatprep.subr.bf16.mxu0 0
      %503 = vmatpush1.bf16.msra.mxu0 %v486
      %504 = vmatprep.subr.bf16.mxu0 0
      %505 = vmatpush2.bf16.msra.mxu0 0
      %506 = vmatprep.subr.bf16.mxu0 0
      %507 = vmatpush2.bf16.msra.mxu0 0
      %508 = vmatprep.subr.bf16.mxu0 0
      %509 = vmatpush2.bf16.msra.mxu0 0
      %510 = vmatprep.subr.bf16.mxu0 0
      %511 = vmatpush2.bf16.msra.mxu0 0
      %512 = vmatprep.subr.bf16.mxu0 0
      %513 = vmatpush2.bf16.msra.mxu0 0
      %514 = vmatprep.subr.bf16.mxu0 0
      %515 = vmatpush2.bf16.msra.mxu0 0
      %516 = vmatprep.subr.bf16.mxu0 0
      %517 = vmatpush2.bf16.msra.mxu0 0
      %518 = vmatprep.subr.bf16.mxu0 0
      %519 = vmatpush2.bf16.msra.mxu0 0
      %520 = vmatprep.mubr.bf16.mxu0 0
      %521 = vmatmul.mubr.bf16.gmra.mxu0 %v482
      %v522 = vpop.f32.mrf.mxu0
      %v523 = vadd.f32 %v468, %v522
      %v524 = vpop.f32.mrf.mxu0
      %v525 = vpop.f32.mrf.mxu0
      %v526 = vadd.f32 %v473, %v525
      %v527 = vpop.f32.mrf.mxu0
      %528 = vdwg.mxu0
      %v529 = vmax.f32 %v523, 0.0
      %v530 = vmax.f32 %v526, 0.0
      %vm531 = vcmask 523264
      %v532 = vsel %vm531, %v529, 0.0
      %533 = vadd.xlane.f32.xlu0 %v532
      %v534 = vpop.xlane.xlu0 %533
      %v535 = vsel %vm531, %v530, 0.0
      %536 = vadd.xlane.f32.xlu0 %v535
      %v537 = vpop.xlane.xlu0 %536
      %vm538 = vcmask 7168
      %539 = vst.msk [vmem:[%s434] sm:$0xff] %vm538, %v534
      %540 = vst.msk [vmem:[%s434 + $0x8] sm:$0xff] %vm538, %v537
      %v541 = vmul.f32 %v529, %v529
      %v542 = vmul.f32 %v530, %v530
      %v543 = vsel %vm531, %v541, 0.0
      %544 = vadd.xlane.f32.xlu0 %v543
      %v545 = vpop.xlane.xlu0 %544
      %v546 = vsel %vm531, %v542, 0.0
      %547 = vadd.xlane.f32.xlu0 %v546
      %v548 = vpop.xlane.xlu0 %547
      %549 = vst.msk [vmem:[%s443] sm:$0xff] %vm538, %v545
      %550 = vst.msk [vmem:[%s443 + $0x8] sm:$0xff] %vm538, %v548
      %v551 = vld [vmem:[%s4] sm:$0x3]
      %v552 = vld [vmem:[%s424] sm:$0xff]
      %v554 = vcombine.high %v552, %v552
      %v556 = vpack.c.bf16 %v552, %v552
      %v557 = vpack.c.bf16 %v554, %v554
      %v558 = vld [vmem:[%s5] sm:$0xf]
      %560 = vset.pattern.permute.xlu0 0
      %561 = vperm.xlu0 %560, %v558
      %v562 = vpop.permute.xlu0 %561
      %vm564 = vcmask 31744
      %v566 = vsel %vm564, %v551, 0
      %vm568 = vcmask 1041408
      %v570 = vsel %vm568, %v556, 0
      %v573 = vsel %vm568, %v557, 0
      %575 = vmatprep.subr.bf16.mxu0 0
      %576 = vmatpush1.bf16.msra.mxu0 0
      %577 = vmatprep.subr.bf16.mxu0 0
      %578 = vmatpush1.bf16.msra.mxu0 0
      %579 = vmatprep.subr.bf16.mxu0 0
      %580 = vmatpush1.bf16.msra.mxu0 0
      %581 = vmatprep.subr.bf16.mxu0 0
      %582 = vmatpush1.bf16.msra.mxu0 0
      %583 = vmatprep.subr.bf16.mxu0 0
      %584 = vmatpush1.bf16.msra.mxu0 0
      %585 = vmatprep.subr.bf16.mxu0 0
      %586 = vmatpush1.bf16.msra.mxu0 0
      %587 = vmatprep.subr.bf16.mxu0 0
      %588 = vmatpush1.bf16.msra.mxu0 0
      %589 = vmatprep.subr.bf16.mxu0 %v573
      %590 = vmatpush1.bf16.msra.mxu0 %v570
      %591 = vmatprep.subr.bf16.mxu0 0
      %592 = vmatpush2.bf16.msra.mxu0 0
      %593 = vmatprep.subr.bf16.mxu0 0
      %594 = vmatpush2.bf16.msra.mxu0 0
      %595 = vmatprep.subr.bf16.mxu0 0
      %596 = vmatpush2.bf16.msra.mxu0 0
      %597 = vmatprep.subr.bf16.mxu0 0
      %598 = vmatpush2.bf16.msra.mxu0 0
      %599 = vmatprep.subr.bf16.mxu0 0
      %600 = vmatpush2.bf16.msra.mxu0 0
      %601 = vmatprep.subr.bf16.mxu0 0
      %602 = vmatpush2.bf16.msra.mxu0 0
      %603 = vmatprep.subr.bf16.mxu0 0
      %604 = vmatpush2.bf16.msra.mxu0 0
      %605 = vmatprep.subr.bf16.mxu0 0
      %606 = vmatpush2.bf16.msra.mxu0 0
      %607 = vmatprep.mubr.bf16.mxu0 0
      %608 = vmatmul.mubr.bf16.gmra.mxu0 %v566
      %v609 = vpop.f32.mrf.mxu0
      %v610 = vadd.f32 %v562, %v609
      %v611 = vpop.f32.mrf.mxu0
      %v612 = vadd.f32 %v562, %v611
      %v613 = vpop.f32.mrf.mxu0
      %v614 = vpop.f32.mrf.mxu0
      %615 = vdwg.mxu0
      %v616 = vmax.f32 %v610, 0.0
      %v617 = vmax.f32 %v612, 0.0
      %v618 = vsel %vm484, %v616, 0.0
      %v619 = vsel %vm484, %v617, 0.0
      %v620 = vadd.f32 %v618, %v619
      %621 = vadd.xlane.f32.xlu0 %v620
      %v622 = vpop.xlane.xlu0 %621
      %vm623 = vcmask 3072
      %624 = vst.msk [vmem:[%s450] sm:$0xf] %vm623, %v622
      %v625 = vmul.f32 %v616, %v616
      %v626 = vmul.f32 %v617, %v617
      %v627 = vsel %vm484, %v625, 0.0
      %v628 = vsel %vm484, %v626, 0.0
      %v629 = vadd.f32 %v627, %v628
      %630 = vadd.xlane.f32.xlu0 %v629
      %v631 = vpop.xlane.xlu0 %630
      %632 = vst.msk [vmem:[%s457] sm:$0xf] %vm623, %v631
      %p633 = scmp.lt.s32.totalorder %s25, 1
      %s634 = scalar_select %p633, %s25, 1
      %p635 = scmp.lt.s32.totalorder %s26, 0
      %s636 = scalar_select %p635, %s26, 0
      %s637 = smul.addr %s636, 2
      %s638 = smul.addr %s634, 2
      %s639 = sadd.s32 %s637, %s638
      %s640 = smul.addr %s639, 8
      %s641 = scalar_lea.vmem %s6, %s640
      %p642 = scmp.lt.s32.totalorder %s25, 1
      %s643 = scalar_select %p642, %s25, 1
      %p644 = scmp.lt.s32.totalorder %s26, 0
      %s645 = scalar_select %p644, %s26, 0
      %s646 = smul.addr %s645, 2
      %s647 = smul.addr %s643, 2
      %s648 = sadd.s32 %s646, %s647
      %s649 = smul.addr %s648, 8
      %s650 = scalar_lea.vmem %s7, %s649
      %p651 = scmp.lt.s32.totalorder %s25, 1
      %s652 = scalar_select %p651, %s25, 1
      %p653 = scmp.lt.s32.totalorder %s26, 0
      %s654 = scalar_select %p653, %s26, 0
      %s655 = sadd.s32 %s654, %s652
      %s656 = smul.addr %s655, 4
      %s657 = scalar_lea.vmem %s8, %s656
      %p658 = scmp.lt.s32.totalorder %s25, 1
      %s659 = scalar_select %p658, %s25, 1
      %p660 = scmp.lt.s32.totalorder %s26, 0
      %s661 = scalar_select %p660, %s26, 0
      %s662 = sadd.s32 %s661, %s659
      %s663 = smul.addr %s662, 4
      %s664 = scalar_lea.vmem %s9, %s663
      // Predicated region
      $region45: #{unet_block_forward.2} parent=43 // pred_check
        %p665 = pneg %p193
      $region46: #{unet_block_forward.2} parent=43 // pred_check_branch
        %667 = sbr.rel (%p665) target = $region48
      $region47: #{unet_block_forward.2} parent=43 // pred_region
        _
      $region48: #{unet_block_forward.2} parent=43 // pred_fallthru
        _
      // Predicated region
      $region49: #{unet_block_forward.2} parent=43 // pred_check
        %p668 = pneg %p221
      $region50: #{unet_block_forward.2} parent=43 // pred_check_branch
        %670 = sbr.rel (%p668) target = $region52
      $region51: #{unet_block_forward.2} parent=43 // pred_region
        _
      $region52: #{unet_block_forward.2} parent=43 // pred_fallthru
        _
      // Predicated region
      $region53: #{unet_block_forward.2} parent=43 // pred_check
        %p671 = pneg %p249
      $region54: #{unet_block_forward.2} parent=43 // pred_check_branch
        %673 = sbr.rel (%p671) target = $region56
      $region55: #{unet_block_forward.2} parent=43 // pred_region
        _
      $region56: #{unet_block_forward.2} parent=43 // pred_fallthru
        _
      // Predicated region
      $region57: #{unet_block_forward.2} parent=43 // pred_check
        %p674 = pneg %p277
      $region58: #{unet_block_forward.2} parent=43 // pred_check_branch
        %676 = sbr.rel (%p674) target = $region60
      $region59: #{unet_block_forward.2} parent=43 // pred_region
        _
      $region60: #{unet_block_forward.2} parent=43 // pred_fallthru
        _
    $region44: #{unet_block_forward.2} parent=5 // pred_fallthru
      _
    %p677 = scmp.le.s32.totalorder 2, %s16
    // Predicated region
    $region61: #{unet_block_forward.2} parent=5 // pred_check
      %p678 = pneg %p677
    $region62: #{unet_block_forward.2} parent=5 // pred_check_branch
      %680 = sbr.rel (%p678) target = $region64
    $region63: #{unet_block_forward.2} parent=5 // pred_region
      %s681 = ssub.s32 %s16, 2
      // Predicated region
      $region65: #{unet_block_forward.2} parent=63 // pred_check
        %p682 = pneg %p199
      $region66: #{unet_block_forward.2} parent=63 // pred_check_branch
        %684 = sbr.rel (%p682) target = $region68
      $region67: #{unet_block_forward.2} parent=63 // pred_region
        %p685 = scmp.lt.s32.totalorder %s27, 1
        %s686 = scalar_select %p685, %s27, 1
        %p687 = scmp.lt.s32.totalorder %s28, 0
        %s688 = scalar_select %p687, %s28, 0
        %s689 = smul.addr %s688, 2
        %s690 = smul.addr %s686, 2
        %s691 = sadd.s32 %s689, %s690
        %s692 = smul.addr %s691, 8
        %s693 = scalar_lea.vmem %s6, %s692
      $region68: #{unet_block_forward.2} parent=63 // pred_fallthru
        _
      // Predicated region
      $region69: #{unet_block_forward.2} parent=63 // pred_check
        %p694 = pneg %p227
      $region70: #{unet_block_forward.2} parent=63 // pred_check_branch
        %696 = sbr.rel (%p694) target = $region72
      $region71: #{unet_block_forward.2} parent=63 // pred_region
        %p697 = scmp.lt.s32.totalorder %s27, 1
        %s698 = scalar_select %p697, %s27, 1
        %p699 = scmp.lt.s32.totalorder %s28, 0
        %s700 = scalar_select %p699, %s28, 0
        %s701 = smul.addr %s700, 2
        %s702 = smul.addr %s698, 2
        %s703 = sadd.s32 %s701, %s702
        %s704 = smul.addr %s703, 8
        %s705 = scalar_lea.vmem %s7, %s704
      $region72: #{unet_block_forward.2} parent=63 // pred_fallthru
        _
      // Predicated region
      $region73: #{unet_block_forward.2} parent=63 // pred_check
        %p706 = pneg %p255
      $region74: #{unet_block_forward.2} parent=63 // pred_check_branch
        %708 = sbr.rel (%p706) target = $region76
      $region75: #{unet_block_forward.2} parent=63 // pred_region
        %p709 = scmp.lt.s32.totalorder %s27, 1
        %s710 = scalar_select %p709, %s27, 1
        %p711 = scmp.lt.s32.totalorder %s28, 0
        %s712 = scalar_select %p711, %s28, 0
        %s713 = sadd.s32 %s712, %s710
        %s714 = smul.addr %s713, 4
        %s715 = scalar_lea.vmem %s8, %s714
      $region76: #{unet_block_forward.2} parent=63 // pred_fallthru
        _
      // Predicated region
      $region77: #{unet_block_forward.2} parent=63 // pred_check
        %p716 = pneg %p283
      $region78: #{unet_block_forward.2} parent=63 // pred_check_branch
        %718 = sbr.rel (%p716) target = $region80
      $region79: #{unet_block_forward.2} parent=63 // pred_region
        %p719 = scmp.lt.s32.totalorder %s27, 1
        %s720 = scalar_select %p719, %s27, 1
        %p721 = scmp.lt.s32.totalorder %s28, 0
        %s722 = scalar_select %p721, %s28, 0
        %s723 = sadd.s32 %s722, %s720
        %s724 = smul.addr %s723, 4
        %s725 = scalar_lea.vmem %s9, %s724
      $region80: #{unet_block_forward.2} parent=63 // pred_fallthru
        _
    $region64: #{unet_block_forward.2} parent=5 // pred_fallthru
      _
  $region6: #{unet_block_forward.2} parent=0 // loop_footer
    %s20 = sadd.s32 1, %s16
  $region7: #{unet_block_forward.2} parent=0 // loop_footer_branch
    %15 = sbr.rel target = $region3
  $region8: #{unet_block_forward.2} parent=0 // loop_exit
    _

</llo_original>
